<compile_context>
chip_gen: v5e
topology: v5e:2x2
jax: 0.10.0
libtpu: 0.0.40
codegen_flags: <defaults>
</compile_context>

<pallas_src>
import jax
import jax.numpy as jnp
from jax.experimental import pallas as pl
from jax.experimental.pallas import tpu as pltpu


# -----------------------------------------------------------------------------
# tiling / VMEM helpers
# -----------------------------------------------------------------------------
def _round_up(x, m):
    return (x + m - 1) // m * m


def _pick_row_tile(m, max_tile=1024):
    """Row tile for parallel matmul kernels: multiple of 8, <= max_tile.
    Caller pads the row count to a multiple of the tile."""
    return min(max_tile, _round_up(max(m, 1), 8))


def _pick_time_chunk(length):
    """Timesteps handled per sequential grid step of the recurrence."""
    for t in (32, 16, 8):
        if length % t == 0:
            return t
    return min(8, length)          # small waste (<8 padded steps) otherwise


def _largest_divisor_leq(n, cap):
    for t in range(min(n, cap), 0, -1):
        if n % t == 0:
            return t
    return 1


_VMEM_LIMIT_CACHE = [None]


def _vmem_limit():
    """3/4 of physical VMEM, capped at 96 MiB (v5e/v6e: 96 MiB, v7x: 48 MiB)."""
    if _VMEM_LIMIT_CACHE[0] is None:
        try:
            cap = pltpu.get_tpu_info().vmem_capacity_bytes
        except Exception:
            cap = 64 * 1024 * 1024
        _VMEM_LIMIT_CACHE[0] = max(32 * 1024 * 1024,
                                   min((cap * 3) // 4, 96 * 1024 * 1024))
    return _VMEM_LIMIT_CACHE[0]


# -----------------------------------------------------------------------------
# Kernel 1: input projection  xg = x @ W_ih + b  (hoisted out of recurrence)
# One fused (rows, I) @ (I, 4*Hp) matmul per row tile; gate blocks are already
# Hp-lane-aligned in the padded weight, so no in-kernel gate shuffling.
# -----------------------------------------------------------------------------
def _input_proj_kernel(x_ref, w_ref, b_ref, y_ref):
    y_ref[...] = (jnp.dot(x_ref[...], w_ref[...],
                          preferred_element_type=jnp.float32) + b_ref[...])


def input_proj(x2d, w_ih, b, tm):
    """x2d: (M_pad, I) bf16 -> (M_pad, 4*Hp) f32 precomputed input gates."""
    m_pad, in_dim = x2d.shape
    four_hp = w_ih.shape[1]
    return pl.pallas_call(
        _input_proj_kernel,
        out_shape=jax.ShapeDtypeStruct((m_pad, four_hp), jnp.float32),
        grid=(m_pad // tm,),
        in_specs=[
            pl.BlockSpec((tm, in_dim), lambda m: (m, 0)),
            pl.BlockSpec((in_dim, four_hp), lambda m: (0, 0)),
            pl.BlockSpec((1, four_hp), lambda m: (0, 0)),
        ],
        out_specs=pl.BlockSpec((tm, four_hp), lambda m: (m, 0)),
        compiler_params=pltpu.CompilerParams(
            dimension_semantics=("parallel",),
            vmem_limit_bytes=_vmem_limit()),
    )(x2d, w_ih, b)


# -----------------------------------------------------------------------------
# Kernel 2: masked LSTM recurrence (LstmRnn.forward, backward=False)
# Grid = (batch blocks ["parallel"], time chunks ["arbitrary"]).  Per chunk a
# statically unrolled loop keeps h, c in f32; state carried across chunks in
# VMEM scratch.  One fused (bsz, Hp) @ (Hp, 4*Hp) bf16 dot per timestep.
# -----------------------------------------------------------------------------
def _lstm_kernel(xg_ref, mask_ref, h0_ref, c0_ref, wcat_ref, h_out_ref,
                 h_scr, c_scr):
    @pl.when(pl.program_id(1) == 0)
    def _():
        h_scr[...] = jnp.broadcast_to(h0_ref[...], h_scr.shape)
        c_scr[...] = jnp.broadcast_to(c0_ref[...], c_scr.shape)

    h = h_scr[...]
    c = c_scr[...]
    w = wcat_ref[...]                       # (Hp, 4*Hp) bf16
    hp = h.shape[-1]
    tc = h_out_ref.shape[0]

    for t in range(tc):                     # static unroll: all indices const
        gates = xg_ref[t] + jnp.dot(h.astype(jnp.bfloat16), w,
                                    preferred_element_type=jnp.float32)
        i_g = jax.nn.sigmoid(gates[:, 0 * hp:1 * hp])   # lane-tile aligned
        f_g = jax.nn.sigmoid(gates[:, 1 * hp:2 * hp])
        g_g = jnp.tanh(gates[:, 2 * hp:3 * hp])
        o_g = jax.nn.sigmoid(gates[:, 3 * hp:4 * hp])
        c_new = f_g * c + i_g * g_g
        h_new = o_g * jnp.tanh(c_new)
        m = mask_ref[t]                     # (bsz, 1) f32; exact ref blend
        one_m = 1.0 - m
        h = h_new * m + h * one_m
        c = c_new * m + c * one_m
        h_out_ref[t] = h                    # dense (bsz, Hp) lane-aligned store

    h_scr[...] = h
    c_scr[...] = c


def lstm_recurrence(xg, mask_t, h0, c0, w_cat, nb, tc):
    """xg: (L_pad, B, 4*Hp) f32, mask_t: (L_pad, B, 1) -> (L_pad, B, Hp) f32."""
    l_pad, batch, four_hp = xg.shape
    hp = four_hp // 4
    bsz = batch // nb
    return pl.pallas_call(
        _lstm_kernel,
        out_shape=jax.ShapeDtypeStruct((l_pad, batch, hp), jnp.float32),
        grid=(nb, l_pad // tc),
        in_specs=[
            pl.BlockSpec((tc, bsz, four_hp), lambda p, t: (t, p, 0)),
            pl.BlockSpec((tc, bsz, 1), lambda p, t: (t, p, 0)),
            pl.BlockSpec((1, hp), lambda p, t: (0, 0)),
            pl.BlockSpec((1, hp), lambda p, t: (0, 0)),
            pl.BlockSpec((hp, four_hp), lambda p, t: (0, 0)),
        ],
        out_specs=pl.BlockSpec((tc, bsz, hp), lambda p, t: (t, p, 0)),
        scratch_shapes=[pltpu.VMEM((bsz, hp), jnp.float32),
                        pltpu.VMEM((bsz, hp), jnp.float32)],
        compiler_params=pltpu.CompilerParams(
            dimension_semantics=("parallel", "arbitrary"),
            vmem_limit_bytes=_vmem_limit()),
    )(xg, mask_t, h0, c0, w_cat)


# -----------------------------------------------------------------------------
# Kernel 3: trans_linear + tanh + chunk(2)   (row-tiled, parallel, two outputs)
# bf16 operands, f32 accumulate.  (Fusing into one (Hp, 2*hid) dot only pays
# when hid % 128 == 0; with hid=32 the two dots avoid non-aligned lane splits.)
# -----------------------------------------------------------------------------
def _linear_tanh_kernel(x_ref, wh_ref, wc_ref, bh_ref, bc_ref, h_ref, c_ref):
    x = x_ref[...].astype(jnp.bfloat16)
    h_ref[...] = jnp.tanh(
        jnp.dot(x, wh_ref[...], preferred_element_type=jnp.float32)
        + bh_ref[...])
    c_ref[...] = jnp.tanh(
        jnp.dot(x, wc_ref[...], preferred_element_type=jnp.float32)
        + bc_ref[...])


def linear_tanh_split(x2d, w_h, w_c, b_h, b_c, tm):
    m_pad, hp = x2d.shape
    hid = w_h.shape[1]
    row_spec = pl.BlockSpec((tm, hp), lambda m: (m, 0))
    out_spec = pl.BlockSpec((tm, hid), lambda m: (m, 0))
    w_spec = pl.BlockSpec((hp, hid), lambda m: (0, 0))
    b_spec = pl.BlockSpec((1, hid), lambda m: (0, 0))
    return pl.pallas_call(
        _linear_tanh_kernel,
        out_shape=(jax.ShapeDtypeStruct((m_pad, hid), jnp.float32),
                   jax.ShapeDtypeStruct((m_pad, hid), jnp.float32)),
        grid=(m_pad // tm,),
        in_specs=[row_spec, w_spec, w_spec, b_spec, b_spec],
        out_specs=(out_spec, out_spec),
        compiler_params=pltpu.CompilerParams(
            dimension_semantics=("parallel",),
            vmem_limit_bytes=_vmem_limit()),
    )(x2d, w_h, w_c, b_h, b_c)


# -----------------------------------------------------------------------------
# Kernel 4: BinaryTreeBasedModule._merge
# cumsum over nodes on the MXU as actions @ upper_triangular; tri is a small
# constant-index_map input (fetched once, no per-step VPU rebuild, no
# pid==0-init hazard under a parallel grid).  Exact arithmetic mask blend.
# -----------------------------------------------------------------------------
def _merge_kernel(actions_ref, mask_ref, tri_ref,
                  h_l_ref, c_l_ref, h_r_ref, c_r_ref, h_p_ref, c_p_ref,
                  h_out_ref, c_out_ref):
    actions = actions_ref[...]                                   # (Tb, N)
    cumsum = jnp.dot(actions, tri_ref[...],
                     preferred_element_type=jnp.float32)
    mask_l = (1.0 - cumsum)[..., None]
    mask_r = (cumsum - actions)[..., None]
    a = actions[..., None]
    m = mask_ref[...][..., None]                                 # (Tb, N, 1)
    one_m = 1.0 - m

    h_l = h_l_ref[...]
    c_l = c_l_ref[...]
    h_new = mask_l * h_l + a * h_p_ref[...] + mask_r * h_r_ref[...]
    c_new = mask_l * c_l + a * c_p_ref[...] + mask_r * c_r_ref[...]
    h_out_ref[...] = h_new * m + h_l * one_m
    c_out_ref[...] = c_new * m + c_l * one_m


@jax.jit
def merge(actions, h_l, c_l, h_r, c_r, h_p, c_p, mask):
    """actions, mask: (B, N) f32; h_*/c_*: (B, N, H) f32 -> (h_p, c_p)."""
    batch, n, hid = h_l.shape
    tb = _largest_divisor_leq(batch, 64)
    tri = (jnp.arange(n)[:, None] <= jnp.arange(n)[None, :]).astype(jnp.float32)
    state_spec = pl.BlockSpec((tb, n, hid), lambda b: (b, 0, 0))
    vec_spec = pl.BlockSpec((tb, n), lambda b: (b, 0))
    tri_spec = pl.BlockSpec((n, n), lambda b: (0, 0))
    return pl.pallas_call(
        _merge_kernel,
        out_shape=(jax.ShapeDtypeStruct((batch, n, hid), jnp.float32),
                   jax.ShapeDtypeStruct((batch, n, hid), jnp.float32)),
        grid=(batch // tb,),
        in_specs=[vec_spec, vec_spec, tri_spec] + [state_spec] * 6,
        out_specs=(state_spec, state_spec),
        compiler_params=pltpu.CompilerParams(
            dimension_semantics=("parallel",),
            vmem_limit_bytes=_vmem_limit()),
    )(actions, mask, tri, h_l, c_l, h_r, c_r, h_p, c_p)


# -----------------------------------------------------------------------------
# Parameter init (deterministic stand-in for reset_parameters)
# -----------------------------------------------------------------------------
def _orthogonal(key, rows, cols):
    a = jax.random.normal(key, (rows, cols), jnp.float32)
    q, r = jnp.linalg.qr(a)
    q = q * jnp.sign(jnp.diag(r))[None, :]
    return q


def init_params(key, input_dim, hidden_dim, trans_hidden_dim):
    k_ih, k_hh, k_lin = jax.random.split(key, 3)
    ht = trans_hidden_dim
    # lstm.weight_ih: xavier_uniform on (4*Ht, I)
    bound = (6.0 / (input_dim + 4 * ht)) ** 0.5
    w_ih = jax.random.uniform(k_ih, (4 * ht, input_dim), jnp.float32,
                              -bound, bound)
    # lstm.weight_hh: orthogonal (4*Ht, Ht)
    w_hh = _orthogonal(k_hh, 4 * ht, ht)
    # trans_linear.weight: orthogonal (2*hidden, Ht)
    w_lin = _orthogonal(k_lin, 2 * hidden_dim, ht)
    w_lin_t = w_lin.T                                       # (Ht, 2*hidden)
    return dict(
        h0=jnp.zeros((1, ht), jnp.float32),
        c0=jnp.zeros((1, ht), jnp.float32),
        w_ih=w_ih.T,                                        # (I, 4*Ht) i,f,g,o
        b_lstm=jnp.zeros((1, 4 * ht), jnp.float32),         # bias_ih+bias_hh=0
        w_hh=w_hh.T,                                        # (Ht, 4*Ht) i,f,g,o
        w_lin_h=w_lin_t[:, :hidden_dim],
        w_lin_c=w_lin_t[:, hidden_dim:],
        b_lin_h=jnp.zeros((1, hidden_dim), jnp.float32),
        b_lin_c=jnp.zeros((1, hidden_dim), jnp.float32),
    )


# -----------------------------------------------------------------------------
# BinaryTreeBasedModule._transform_leafs
# -----------------------------------------------------------------------------
@jax.jit
def transform_leafs(params, x, mask):
    """x: (B, L, I), mask: (B, L) -> (h, c), each (B, L, hidden_dim)."""
    batch, length, in_dim = x.shape
    ht = params["h0"].shape[-1]
    hid = params["w_lin_h"].shape[1]
    hp = _round_up(ht, 128)                 # lane-pad Ht so gate slices align

    # ---- pad & pack params (gate blocks re-aligned to Hp-wide lane tiles) ----
    def pad_gates(w):                       # (..., 4*Ht) -> (..., 4*Hp)
        lead = w.shape[:-1]
        w4 = w.reshape(lead + (4, ht))
        w4 = jnp.pad(w4, [(0, 0)] * len(lead) + [(0, 0), (0, hp - ht)])
        return w4.reshape(lead + (4 * hp,))

    w_ih = pad_gates(params["w_ih"]).astype(jnp.bfloat16)          # (I, 4*Hp)
    b_lstm = pad_gates(params["b_lstm"])                           # (1, 4*Hp)
    w_cat = pad_gates(
        jnp.pad(params["w_hh"], ((0, hp - ht), (0, 0)))
    ).astype(jnp.bfloat16)                                         # (Hp, 4*Hp)
    h0 = jnp.pad(params["h0"], ((0, 0), (0, hp - ht)))
    c0 = jnp.pad(params["c0"], ((0, 0), (0, hp - ht)))
    w_lin_h = jnp.pad(params["w_lin_h"], ((0, hp - ht), (0, 0))).astype(jnp.bfloat16)
    w_lin_c = jnp.pad(params["w_lin_c"], ((0, hp - ht), (0, 0))).astype(jnp.bfloat16)

    # ---- time-major inputs, padded to tile multiples ----
    tc = _pick_time_chunk(length)
    l_pad = _round_up(length, tc)
    x_t = jnp.transpose(x, (1, 0, 2)).astype(jnp.bfloat16)         # (L, B, I)
    x_t = jnp.pad(x_t, ((0, l_pad - length), (0, 0), (0, 0)))
    mask_t = jnp.transpose(mask.astype(jnp.float32), (1, 0))
    mask_t = jnp.pad(mask_t, ((0, l_pad - length), (0, 0)))[:, :, None]

    # ---- hoisted input projection (parallel) ----
    m_rows = l_pad * batch
    tm = _pick_row_tile(m_rows)
    m_pad = _round_up(m_rows, tm)
    x2d = jnp.pad(x_t.reshape(m_rows, in_dim), ((0, m_pad - m_rows), (0, 0)))
    xg2d = input_proj(x2d, w_ih, b_lstm, tm)                       # (m_pad, 4*Hp)
    xg = xg2d[:m_rows].reshape(l_pad, batch, 4 * hp)

    # ---- serial masked recurrence (time-major, fused per-step matmul) ----
    nb = 2 if (batch % 16 == 0 and batch >= 16) else 1
    h_all = lstm_recurrence(xg, mask_t, h0, c0, w_cat, nb, tc)     # (l_pad,B,Hp)

    # ---- trans_linear + tanh + chunk(2) (parallel) ----
    h2d = h_all.reshape(m_rows, hp)
    tm2 = _pick_row_tile(m_rows)
    m2_pad = _round_up(m_rows, tm2)
    h2d = jnp.pad(h2d, ((0, m2_pad - m_rows), (0, 0)))
    h, c = linear_tanh_split(h2d, w_lin_h, w_lin_c,
                             params["b_lin_h"], params["b_lin_c"], tm2)
    h = h[:m_rows].reshape(l_pad, batch, hid)[:length].transpose(1, 0, 2)
    c = c[:m_rows].reshape(l_pad, batch, hid)[:length].transpose(1, 0, 2)
    return h, c


# -----------------------------------------------------------------------------
# Pure-JAX references (correctness check)
# -----------------------------------------------------------------------------
def _ref_transform_leafs(params, x, mask):
    batch, length, _ = x.shape
    ht = params["h0"].shape[-1]
    prec = jax.lax.Precision.HIGHEST
    h_prev = jnp.broadcast_to(params["h0"], (batch, ht))
    c_prev = jnp.broadcast_to(params["c0"], (batch, ht))
    hs = []
    for t in range(length):
        gates = (jnp.dot(x[:, t], params["w_ih"], precision=prec)
                 + jnp.dot(h_prev, params["w_hh"], precision=prec)
                 + params["b_lstm"])
        i_g = jax.nn.sigmoid(gates[:, 0 * ht:1 * ht])
        f_g = jax.nn.sigmoid(gates[:, 1 * ht:2 * ht])
        g_g = jnp.tanh(gates[:, 2 * ht:3 * ht])
        o_g = jax.nn.sigmoid(gates[:, 3 * ht:4 * ht])
        c_new = f_g * c_prev + i_g * g_g
        h_new = o_g * jnp.tanh(c_new)
        m = mask[:, t, None]
        h_prev = h_new * m + h_prev * (1.0 - m)
        c_prev = c_new * m + c_prev * (1.0 - m)
        hs.append(h_prev)
    h_all = jnp.stack(hs, axis=1)
    h = jnp.tanh(jnp.dot(h_all, params["w_lin_h"], precision=prec)
                 + params["b_lin_h"])
    c = jnp.tanh(jnp.dot(h_all, params["w_lin_c"], precision=prec)
                 + params["b_lin_c"])
    return h, c


def _ref_merge(actions, h_l, c_l, h_r, c_r, h_p, c_p, mask):
    cumsum = jnp.cumsum(actions, axis=-1)
    mask_l = (1.0 - cumsum)[..., None]
    mask_r = (cumsum - actions)[..., None]
    m = mask[..., None]
    a = actions[..., None]
    h_out = (mask_l * h_l + a * h_p + mask_r * h_r) * m + h_l * (1.0 - m)
    c_out = (mask_l * c_l + a * c_p + mask_r * c_r) * m + c_l * (1.0 - m)
    return h_out, c_out


# -----------------------------------------------------------------------------
if __name__ == "__main__":
    B, L, I = 2, 8, 16           # batch, seq, input_dim
    HIDDEN = 32                  # hidden_dim
    TRANS_HIDDEN = 32            # trans_hidden_dim
    N = 8                        # number of tree nodes for _merge demo

    key = jax.random.PRNGKey(0)
    kp, kx, km, ka, kmm, *kh = jax.random.split(key, 11)

    params = init_params(kp, I, HIDDEN, TRANS_HIDDEN)

    x = jax.random.normal(kx, (B, L, I), jnp.float32)
    mask = (jax.random.uniform(km, (B, L)) > 0.3).astype(jnp.float32)

    # _transform_leafs via Pallas kernels
    h_leaf, c_leaf = transform_leafs(params, x, mask)
    jax.block_until_ready((h_leaf, c_leaf))

    h_ref, c_ref = _ref_transform_leafs(params, x, mask)
    assert h_leaf.shape == (B, L, HIDDEN) and c_leaf.shape == (B, L, HIDDEN)
    assert jnp.allclose(h_leaf, h_ref, atol=2e-2, rtol=2e-2)
    assert jnp.allclose(c_leaf, c_ref, atol=2e-2, rtol=2e-2)

    # _merge via Pallas kernel
    actions = jax.nn.one_hot(
        jax.random.randint(ka, (B,), 0, N), N, dtype=jnp.float32)
    node_mask = (jax.random.uniform(kmm, (B, N)) > 0.2).astype(jnp.float32)
    h_l, c_l, h_r, c_r, h_p, c_p = (
        jax.random.normal(k, (B, N, HIDDEN), jnp.float32) for k in kh[:6])

    h_m, c_m = merge(actions, h_l, c_l, h_r, c_r, h_p, c_p, node_mask)
    jax.block_until_ready((h_m, c_m))

    h_m_ref, c_m_ref = _ref_merge(actions, h_l, c_l, h_r, c_r, h_p, c_p,
                                  node_mask)
    assert jnp.allclose(h_m, h_m_ref, atol=1e-3, rtol=1e-3)
    assert jnp.allclose(c_m, c_m_ref, atol=1e-3, rtol=1e-3)

    print("KERNEL_OK")
</pallas_src>

<mosaic_0001>
module attributes {stable_mosaic.version = 11 : i64} {
  func.func @_lstm_kernel(%arg0: i32, %arg1: i32, %arg2: memref<8x2x512xf32, #tpu.memory_space<vmem>>, %arg3: memref<8x2x1xf32, #tpu.memory_space<vmem>>, %arg4: memref<1x128xf32, #tpu.memory_space<vmem>>, %arg5: memref<1x128xf32, #tpu.memory_space<vmem>>, %arg6: memref<128x512xbf16, #tpu.memory_space<vmem>>, %arg7: memref<8x2x128xf32, #tpu.memory_space<vmem>>, %arg8: memref<2x128xf32, #tpu.memory_space<vmem>>, %arg9: memref<2x128xf32, #tpu.memory_space<vmem>>) attributes {dimension_semantics = [#tpu.dimension_semantics<parallel>, #tpu.dimension_semantics<arbitrary>], iteration_bounds = array<i64: 1, 1>, scalar_prefetch = 0 : i64, scratch_operands = 2 : i64, tpu.core_type = #tpu.core_type<tc>, window_params = [{transform_indices = @transform_0, window_bounds = array<i64: 8, 2, 512>}, {transform_indices = @transform_1, window_bounds = array<i64: 8, 2, 1>}, {pipeline_mode = #tpu.pipeline_mode<synchronous>, transform_indices = @transform_2, window_bounds = array<i64: 1, 128>}, {pipeline_mode = #tpu.pipeline_mode<synchronous>, transform_indices = @transform_3, window_bounds = array<i64: 1, 128>}, {pipeline_mode = #tpu.pipeline_mode<synchronous>, transform_indices = @transform_4, window_bounds = array<i64: 128, 512>}, {transform_indices = @transform_5, window_bounds = array<i64: 8, 2, 128>}]} {
    %c0_i32 = arith.constant 0 : i32
    %0 = arith.cmpi eq, %arg1, %c0_i32 : i32
    %1 = arith.extui %0 : i1 to i32
    %c0_i32_0 = arith.constant 0 : i32
    %2 = arith.cmpi ne, %1, %c0_i32_0 : i32
    scf.if %2 {
      %c0_114 = arith.constant 0 : index
      %c0_115 = arith.constant 0 : index
      %384 = vector.load %arg4[%c0_114, %c0_115] : memref<1x128xf32, #tpu.memory_space<vmem>>, vector<1x128xf32>
      %385 = vector.shape_cast %384 : vector<1x128xf32> to vector<1x128xf32>
      %386 = vector.broadcast %385 : vector<1x128xf32> to vector<2x128xf32>
      %c0_116 = arith.constant 0 : index
      %c0_117 = arith.constant 0 : index
      %387 = vector.load %arg8[%c0_116, %c0_117] : memref<2x128xf32, #tpu.memory_space<vmem>>, vector<2x128xf32>
      tpu.vector_store %arg8[%c0_116, %c0_117], %386 {strides = array<i32>} : memref<2x128xf32, #tpu.memory_space<vmem>>, vector<2x128xf32>,
      %c0_118 = arith.constant 0 : index
      %c0_119 = arith.constant 0 : index
      %388 = vector.load %arg5[%c0_118, %c0_119] : memref<1x128xf32, #tpu.memory_space<vmem>>, vector<1x128xf32>
      %389 = vector.shape_cast %388 : vector<1x128xf32> to vector<1x128xf32>
      %390 = vector.broadcast %389 : vector<1x128xf32> to vector<2x128xf32>
      %c0_120 = arith.constant 0 : index
      %c0_121 = arith.constant 0 : index
      %391 = vector.load %arg9[%c0_120, %c0_121] : memref<2x128xf32, #tpu.memory_space<vmem>>, vector<2x128xf32>
      tpu.vector_store %arg9[%c0_120, %c0_121], %390 {strides = array<i32>} : memref<2x128xf32, #tpu.memory_space<vmem>>, vector<2x128xf32>,
    } else {
    }
    %c0 = arith.constant 0 : index
    %c0_1 = arith.constant 0 : index
    %3 = vector.load %arg8[%c0, %c0_1] : memref<2x128xf32, #tpu.memory_space<vmem>>, vector<2x128xf32>
    %c0_2 = arith.constant 0 : index
    %c0_3 = arith.constant 0 : index
    %4 = vector.load %arg9[%c0_2, %c0_3] : memref<2x128xf32, #tpu.memory_space<vmem>>, vector<2x128xf32>
    %c0_4 = arith.constant 0 : index
    %c0_5 = arith.constant 0 : index
    %5 = vector.load %arg6[%c0_4, %c0_5] : memref<128x512xbf16, #tpu.memory_space<vmem>>, vector<128x512xbf16>
    %c0_6 = arith.constant 0 : index
    %c0_7 = arith.constant 0 : index
    %c0_8 = arith.constant 0 : index
    %6 = vector.load %arg2[%c0_6, %c0_7, %c0_8] : memref<8x2x512xf32, #tpu.memory_space<vmem>>, vector<1x2x512xf32>
    %7 = vector.shape_cast %6 : vector<1x2x512xf32> to vector<2x512xf32>
    %8 = arith.truncf %3 : vector<2x128xf32> to vector<2x128xbf16>
    %cst = arith.constant dense<0.000000e+00> : vector<2x512xf32>
    %9 = tpu.matmul %8, %5, %cst {dimension_numbers = #tpu.dot_dimension_numbers<[1], [0], [0], [1], [0, 0, 1, 1], [], []>} : vector<2x128xbf16>, vector<128x512xbf16>, vector<2x512xf32> -> vector<2x512xf32>
    %10 = arith.addf %7, %9 : vector<2x512xf32>
    %11 = vector.extract_strided_slice %10 {offsets = [0, 0], sizes = [2, 128], strides = [1, 1]} : vector<2x512xf32> to vector<2x128xf32>
    %12 = arith.negf %11 : vector<2x128xf32>
    %13 = math.exp %12 : vector<2x128xf32>
    %cst_9 = arith.constant 1.000000e+00 : f32
    %14 = vector.broadcast %cst_9 : f32 to vector<2x128xf32>
    %15 = arith.addf %14, %13 : vector<2x128xf32>
    %16 = arith.divf %14, %15 : vector<2x128xf32>
    %17 = vector.extract_strided_slice %10 {offsets = [0, 128], sizes = [2, 128], strides = [1, 1]} : vector<2x512xf32> to vector<2x128xf32>
    %18 = arith.negf %17 : vector<2x128xf32>
    %19 = math.exp %18 : vector<2x128xf32>
    %cst_10 = arith.constant 1.000000e+00 : f32
    %20 = vector.broadcast %cst_10 : f32 to vector<2x128xf32>
    %21 = arith.addf %20, %19 : vector<2x128xf32>
    %22 = arith.divf %20, %21 : vector<2x128xf32>
    %23 = vector.extract_strided_slice %10 {offsets = [0, 256], sizes = [2, 128], strides = [1, 1]} : vector<2x512xf32> to vector<2x128xf32>
    %24 = math.tanh %23 : vector<2x128xf32>
    %25 = vector.extract_strided_slice %10 {offsets = [0, 384], sizes = [2, 128], strides = [1, 1]} : vector<2x512xf32> to vector<2x128xf32>
    %26 = arith.negf %25 : vector<2x128xf32>
    %27 = math.exp %26 : vector<2x128xf32>
    %cst_11 = arith.constant 1.000000e+00 : f32
    %28 = vector.broadcast %cst_11 : f32 to vector<2x128xf32>
    %29 = arith.addf %28, %27 : vector<2x128xf32>
    %30 = arith.divf %28, %29 : vector<2x128xf32>
    %31 = arith.mulf %22, %4 : vector<2x128xf32>
    %32 = arith.mulf %16, %24 : vector<2x128xf32>
    %33 = arith.addf %31, %32 : vector<2x128xf32>
    %34 = math.tanh %33 : vector<2x128xf32>
    %35 = arith.mulf %30, %34 : vector<2x128xf32>
    %c0_12 = arith.constant 0 : index
    %c0_13 = arith.constant 0 : index
    %c0_14 = arith.constant 0 : index
    %36 = vector.load %arg3[%c0_12, %c0_13, %c0_14] : memref<8x2x1xf32, #tpu.memory_space<vmem>>, vector<1x2x1xf32>
    %37 = vector.shape_cast %36 : vector<1x2x1xf32> to vector<2x1xf32>
    %cst_15 = arith.constant 1.000000e+00 : f32
    %38 = vector.broadcast %cst_15 : f32 to vector<2x1xf32>
    %39 = arith.subf %38, %37 : vector<2x1xf32>
    %40 = vector.broadcast %37 : vector<2x1xf32> to vector<2x128xf32>
    %41 = arith.mulf %35, %40 : vector<2x128xf32>
    %42 = vector.broadcast %39 : vector<2x1xf32> to vector<2x128xf32>
    %43 = arith.mulf %3, %42 : vector<2x128xf32>
    %44 = arith.addf %41, %43 : vector<2x128xf32>
    %45 = vector.broadcast %37 : vector<2x1xf32> to vector<2x128xf32>
    %46 = arith.mulf %33, %45 : vector<2x128xf32>
    %47 = vector.broadcast %39 : vector<2x1xf32> to vector<2x128xf32>
    %48 = arith.mulf %4, %47 : vector<2x128xf32>
    %49 = arith.addf %46, %48 : vector<2x128xf32>
    %c0_16 = arith.constant 0 : index
    %c0_17 = arith.constant 0 : index
    %c0_18 = arith.constant 0 : index
    %50 = vector.load %arg7[%c0_16, %c0_17, %c0_18] : memref<8x2x128xf32, #tpu.memory_space<vmem>>, vector<1x2x128xf32>
    %51 = vector.shape_cast %50 : vector<1x2x128xf32> to vector<2x128xf32>
    %52 = vector.shape_cast %44 : vector<2x128xf32> to vector<1x2x128xf32>
    tpu.vector_store %arg7[%c0_16, %c0_17, %c0_18], %52 {strides = array<i32>} : memref<8x2x128xf32, #tpu.memory_space<vmem>>, vector<1x2x128xf32>,
    %c1 = arith.constant 1 : index
    %c0_19 = arith.constant 0 : index
    %c0_20 = arith.constant 0 : index
    %53 = vector.load %arg2[%c1, %c0_19, %c0_20] : memref<8x2x512xf32, #tpu.memory_space<vmem>>, vector<1x2x512xf32>
    %54 = vector.shape_cast %53 : vector<1x2x512xf32> to vector<2x512xf32>
    %55 = arith.truncf %44 : vector<2x128xf32> to vector<2x128xbf16>
    %cst_21 = arith.constant dense<0.000000e+00> : vector<2x512xf32>
    %56 = tpu.matmul %55, %5, %cst_21 {dimension_numbers = #tpu.dot_dimension_numbers<[1], [0], [0], [1], [0, 0, 1, 1], [], []>} : vector<2x128xbf16>, vector<128x512xbf16>, vector<2x512xf32> -> vector<2x512xf32>
    %57 = arith.addf %54, %56 : vector<2x512xf32>
    %58 = vector.extract_strided_slice %57 {offsets = [0, 0], sizes = [2, 128], strides = [1, 1]} : vector<2x512xf32> to vector<2x128xf32>
    %59 = arith.negf %58 : vector<2x128xf32>
    %60 = math.exp %59 : vector<2x128xf32>
    %cst_22 = arith.constant 1.000000e+00 : f32
    %61 = vector.broadcast %cst_22 : f32 to vector<2x128xf32>
    %62 = arith.addf %61, %60 : vector<2x128xf32>
    %63 = arith.divf %61, %62 : vector<2x128xf32>
    %64 = vector.extract_strided_slice %57 {offsets = [0, 128], sizes = [2, 128], strides = [1, 1]} : vector<2x512xf32> to vector<2x128xf32>
    %65 = arith.negf %64 : vector<2x128xf32>
    %66 = math.exp %65 : vector<2x128xf32>
    %cst_23 = arith.constant 1.000000e+00 : f32
    %67 = vector.broadcast %cst_23 : f32 to vector<2x128xf32>
    %68 = arith.addf %67, %66 : vector<2x128xf32>
    %69 = arith.divf %67, %68 : vector<2x128xf32>
    %70 = vector.extract_strided_slice %57 {offsets = [0, 256], sizes = [2, 128], strides = [1, 1]} : vector<2x512xf32> to vector<2x128xf32>
    %71 = math.tanh %70 : vector<2x128xf32>
    %72 = vector.extract_strided_slice %57 {offsets = [0, 384], sizes = [2, 128], strides = [1, 1]} : vector<2x512xf32> to vector<2x128xf32>
    %73 = arith.negf %72 : vector<2x128xf32>
    %74 = math.exp %73 : vector<2x128xf32>
    %cst_24 = arith.constant 1.000000e+00 : f32
    %75 = vector.broadcast %cst_24 : f32 to vector<2x128xf32>
    %76 = arith.addf %75, %74 : vector<2x128xf32>
    %77 = arith.divf %75, %76 : vector<2x128xf32>
    %78 = arith.mulf %69, %49 : vector<2x128xf32>
    %79 = arith.mulf %63, %71 : vector<2x128xf32>
    %80 = arith.addf %78, %79 : vector<2x128xf32>
    %81 = math.tanh %80 : vector<2x128xf32>
    %82 = arith.mulf %77, %81 : vector<2x128xf32>
    %c1_25 = arith.constant 1 : index
    %c0_26 = arith.constant 0 : index
    %c0_27 = arith.constant 0 : index
    %83 = vector.load %arg3[%c1_25, %c0_26, %c0_27] : memref<8x2x1xf32, #tpu.memory_space<vmem>>, vector<1x2x1xf32>
    %84 = vector.shape_cast %83 : vector<1x2x1xf32> to vector<2x1xf32>
    %cst_28 = arith.constant 1.000000e+00 : f32
    %85 = vector.broadcast %cst_28 : f32 to vector<2x1xf32>
    %86 = arith.subf %85, %84 : vector<2x1xf32>
    %87 = vector.broadcast %84 : vector<2x1xf32> to vector<2x128xf32>
    %88 = arith.mulf %82, %87 : vector<2x128xf32>
    %89 = vector.broadcast %86 : vector<2x1xf32> to vector<2x128xf32>
    %90 = arith.mulf %44, %89 : vector<2x128xf32>
    %91 = arith.addf %88, %90 : vector<2x128xf32>
    %92 = vector.broadcast %84 : vector<2x1xf32> to vector<2x128xf32>
    %93 = arith.mulf %80, %92 : vector<2x128xf32>
    %94 = vector.broadcast %86 : vector<2x1xf32> to vector<2x128xf32>
    %95 = arith.mulf %49, %94 : vector<2x128xf32>
    %96 = arith.addf %93, %95 : vector<2x128xf32>
    %c1_29 = arith.constant 1 : index
    %c0_30 = arith.constant 0 : index
    %c0_31 = arith.constant 0 : index
    %97 = vector.load %arg7[%c1_29, %c0_30, %c0_31] : memref<8x2x128xf32, #tpu.memory_space<vmem>>, vector<1x2x128xf32>
    %98 = vector.shape_cast %97 : vector<1x2x128xf32> to vector<2x128xf32>
    %99 = vector.shape_cast %91 : vector<2x128xf32> to vector<1x2x128xf32>
    tpu.vector_store %arg7[%c1_29, %c0_30, %c0_31], %99 {strides = array<i32>} : memref<8x2x128xf32, #tpu.memory_space<vmem>>, vector<1x2x128xf32>,
    %c2 = arith.constant 2 : index
    %c0_32 = arith.constant 0 : index
    %c0_33 = arith.constant 0 : index
    %100 = vector.load %arg2[%c2, %c0_32, %c0_33] : memref<8x2x512xf32, #tpu.memory_space<vmem>>, vector<1x2x512xf32>
    %101 = vector.shape_cast %100 : vector<1x2x512xf32> to vector<2x512xf32>
    %102 = arith.truncf %91 : vector<2x128xf32> to vector<2x128xbf16>
    %cst_34 = arith.constant dense<0.000000e+00> : vector<2x512xf32>
    %103 = tpu.matmul %102, %5, %cst_34 {dimension_numbers = #tpu.dot_dimension_numbers<[1], [0], [0], [1], [0, 0, 1, 1], [], []>} : vector<2x128xbf16>, vector<128x512xbf16>, vector<2x512xf32> -> vector<2x512xf32>
    %104 = arith.addf %101, %103 : vector<2x512xf32>
    %105 = vector.extract_strided_slice %104 {offsets = [0, 0], sizes = [2, 128], strides = [1, 1]} : vector<2x512xf32> to vector<2x128xf32>
    %106 = arith.negf %105 : vector<2x128xf32>
    %107 = math.exp %106 : vector<2x128xf32>
    %cst_35 = arith.constant 1.000000e+00 : f32
    %108 = vector.broadcast %cst_35 : f32 to vector<2x128xf32>
    %109 = arith.addf %108, %107 : vector<2x128xf32>
    %110 = arith.divf %108, %109 : vector<2x128xf32>
    %111 = vector.extract_strided_slice %104 {offsets = [0, 128], sizes = [2, 128], strides = [1, 1]} : vector<2x512xf32> to vector<2x128xf32>
    %112 = arith.negf %111 : vector<2x128xf32>
    %113 = math.exp %112 : vector<2x128xf32>
    %cst_36 = arith.constant 1.000000e+00 : f32
    %114 = vector.broadcast %cst_36 : f32 to vector<2x128xf32>
    %115 = arith.addf %114, %113 : vector<2x128xf32>
    %116 = arith.divf %114, %115 : vector<2x128xf32>
    %117 = vector.extract_strided_slice %104 {offsets = [0, 256], sizes = [2, 128], strides = [1, 1]} : vector<2x512xf32> to vector<2x128xf32>
    %118 = math.tanh %117 : vector<2x128xf32>
    %119 = vector.extract_strided_slice %104 {offsets = [0, 384], sizes = [2, 128], strides = [1, 1]} : vector<2x512xf32> to vector<2x128xf32>
    %120 = arith.negf %119 : vector<2x128xf32>
    %121 = math.exp %120 : vector<2x128xf32>
    %cst_37 = arith.constant 1.000000e+00 : f32
    %122 = vector.broadcast %cst_37 : f32 to vector<2x128xf32>
    %123 = arith.addf %122, %121 : vector<2x128xf32>
    %124 = arith.divf %122, %123 : vector<2x128xf32>
    %125 = arith.mulf %116, %96 : vector<2x128xf32>
    %126 = arith.mulf %110, %118 : vector<2x128xf32>
    %127 = arith.addf %125, %126 : vector<2x128xf32>
    %128 = math.tanh %127 : vector<2x128xf32>
    %129 = arith.mulf %124, %128 : vector<2x128xf32>
    %c2_38 = arith.constant 2 : index
    %c0_39 = arith.constant 0 : index
    %c0_40 = arith.constant 0 : index
    %130 = vector.load %arg3[%c2_38, %c0_39, %c0_40] : memref<8x2x1xf32, #tpu.memory_space<vmem>>, vector<1x2x1xf32>
    %131 = vector.shape_cast %130 : vector<1x2x1xf32> to vector<2x1xf32>
    %cst_41 = arith.constant 1.000000e+00 : f32
    %132 = vector.broadcast %cst_41 : f32 to vector<2x1xf32>
    %133 = arith.subf %132, %131 : vector<2x1xf32>
    %134 = vector.broadcast %131 : vector<2x1xf32> to vector<2x128xf32>
    %135 = arith.mulf %129, %134 : vector<2x128xf32>
    %136 = vector.broadcast %133 : vector<2x1xf32> to vector<2x128xf32>
    %137 = arith.mulf %91, %136 : vector<2x128xf32>
    %138 = arith.addf %135, %137 : vector<2x128xf32>
    %139 = vector.broadcast %131 : vector<2x1xf32> to vector<2x128xf32>
    %140 = arith.mulf %127, %139 : vector<2x128xf32>
    %141 = vector.broadcast %133 : vector<2x1xf32> to vector<2x128xf32>
    %142 = arith.mulf %96, %141 : vector<2x128xf32>
    %143 = arith.addf %140, %142 : vector<2x128xf32>
    %c2_42 = arith.constant 2 : index
    %c0_43 = arith.constant 0 : index
    %c0_44 = arith.constant 0 : index
    %144 = vector.load %arg7[%c2_42, %c0_43, %c0_44] : memref<8x2x128xf32, #tpu.memory_space<vmem>>, vector<1x2x128xf32>
    %145 = vector.shape_cast %144 : vector<1x2x128xf32> to vector<2x128xf32>
    %146 = vector.shape_cast %138 : vector<2x128xf32> to vector<1x2x128xf32>
    tpu.vector_store %arg7[%c2_42, %c0_43, %c0_44], %146 {strides = array<i32>} : memref<8x2x128xf32, #tpu.memory_space<vmem>>, vector<1x2x128xf32>,
    %c3 = arith.constant 3 : index
    %c0_45 = arith.constant 0 : index
    %c0_46 = arith.constant 0 : index
    %147 = vector.load %arg2[%c3, %c0_45, %c0_46] : memref<8x2x512xf32, #tpu.memory_space<vmem>>, vector<1x2x512xf32>
    %148 = vector.shape_cast %147 : vector<1x2x512xf32> to vector<2x512xf32>
    %149 = arith.truncf %138 : vector<2x128xf32> to vector<2x128xbf16>
    %cst_47 = arith.constant dense<0.000000e+00> : vector<2x512xf32>
    %150 = tpu.matmul %149, %5, %cst_47 {dimension_numbers = #tpu.dot_dimension_numbers<[1], [0], [0], [1], [0, 0, 1, 1], [], []>} : vector<2x128xbf16>, vector<128x512xbf16>, vector<2x512xf32> -> vector<2x512xf32>
    %151 = arith.addf %148, %150 : vector<2x512xf32>
    %152 = vector.extract_strided_slice %151 {offsets = [0, 0], sizes = [2, 128], strides = [1, 1]} : vector<2x512xf32> to vector<2x128xf32>
    %153 = arith.negf %152 : vector<2x128xf32>
    %154 = math.exp %153 : vector<2x128xf32>
    %cst_48 = arith.constant 1.000000e+00 : f32
    %155 = vector.broadcast %cst_48 : f32 to vector<2x128xf32>
    %156 = arith.addf %155, %154 : vector<2x128xf32>
    %157 = arith.divf %155, %156 : vector<2x128xf32>
    %158 = vector.extract_strided_slice %151 {offsets = [0, 128], sizes = [2, 128], strides = [1, 1]} : vector<2x512xf32> to vector<2x128xf32>
    %159 = arith.negf %158 : vector<2x128xf32>
    %160 = math.exp %159 : vector<2x128xf32>
    %cst_49 = arith.constant 1.000000e+00 : f32
    %161 = vector.broadcast %cst_49 : f32 to vector<2x128xf32>
    %162 = arith.addf %161, %160 : vector<2x128xf32>
    %163 = arith.divf %161, %162 : vector<2x128xf32>
    %164 = vector.extract_strided_slice %151 {offsets = [0, 256], sizes = [2, 128], strides = [1, 1]} : vector<2x512xf32> to vector<2x128xf32>
    %165 = math.tanh %164 : vector<2x128xf32>
    %166 = vector.extract_strided_slice %151 {offsets = [0, 384], sizes = [2, 128], strides = [1, 1]} : vector<2x512xf32> to vector<2x128xf32>
    %167 = arith.negf %166 : vector<2x128xf32>
    %168 = math.exp %167 : vector<2x128xf32>
    %cst_50 = arith.constant 1.000000e+00 : f32
    %169 = vector.broadcast %cst_50 : f32 to vector<2x128xf32>
    %170 = arith.addf %169, %168 : vector<2x128xf32>
    %171 = arith.divf %169, %170 : vector<2x128xf32>
    %172 = arith.mulf %163, %143 : vector<2x128xf32>
    %173 = arith.mulf %157, %165 : vector<2x128xf32>
    %174 = arith.addf %172, %173 : vector<2x128xf32>
    %175 = math.tanh %174 : vector<2x128xf32>
    %176 = arith.mulf %171, %175 : vector<2x128xf32>
    %c3_51 = arith.constant 3 : index
    %c0_52 = arith.constant 0 : index
    %c0_53 = arith.constant 0 : index
    %177 = vector.load %arg3[%c3_51, %c0_52, %c0_53] : memref<8x2x1xf32, #tpu.memory_space<vmem>>, vector<1x2x1xf32>
    %178 = vector.shape_cast %177 : vector<1x2x1xf32> to vector<2x1xf32>
    %cst_54 = arith.constant 1.000000e+00 : f32
    %179 = vector.broadcast %cst_54 : f32 to vector<2x1xf32>
    %180 = arith.subf %179, %178 : vector<2x1xf32>
    %181 = vector.broadcast %178 : vector<2x1xf32> to vector<2x128xf32>
    %182 = arith.mulf %176, %181 : vector<2x128xf32>
    %183 = vector.broadcast %180 : vector<2x1xf32> to vector<2x128xf32>
    %184 = arith.mulf %138, %183 : vector<2x128xf32>
    %185 = arith.addf %182, %184 : vector<2x128xf32>
    %186 = vector.broadcast %178 : vector<2x1xf32> to vector<2x128xf32>
    %187 = arith.mulf %174, %186 : vector<2x128xf32>
    %188 = vector.broadcast %180 : vector<2x1xf32> to vector<2x128xf32>
    %189 = arith.mulf %143, %188 : vector<2x128xf32>
    %190 = arith.addf %187, %189 : vector<2x128xf32>
    %c3_55 = arith.constant 3 : index
    %c0_56 = arith.constant 0 : index
    %c0_57 = arith.constant 0 : index
    %191 = vector.load %arg7[%c3_55, %c0_56, %c0_57] : memref<8x2x128xf32, #tpu.memory_space<vmem>>, vector<1x2x128xf32>
    %192 = vector.shape_cast %191 : vector<1x2x128xf32> to vector<2x128xf32>
    %193 = vector.shape_cast %185 : vector<2x128xf32> to vector<1x2x128xf32>
    tpu.vector_store %arg7[%c3_55, %c0_56, %c0_57], %193 {strides = array<i32>} : memref<8x2x128xf32, #tpu.memory_space<vmem>>, vector<1x2x128xf32>,
    %c4 = arith.constant 4 : index
    %c0_58 = arith.constant 0 : index
    %c0_59 = arith.constant 0 : index
    %194 = vector.load %arg2[%c4, %c0_58, %c0_59] : memref<8x2x512xf32, #tpu.memory_space<vmem>>, vector<1x2x512xf32>
    %195 = vector.shape_cast %194 : vector<1x2x512xf32> to vector<2x512xf32>
    %196 = arith.truncf %185 : vector<2x128xf32> to vector<2x128xbf16>
    %cst_60 = arith.constant dense<0.000000e+00> : vector<2x512xf32>
    %197 = tpu.matmul %196, %5, %cst_60 {dimension_numbers = #tpu.dot_dimension_numbers<[1], [0], [0], [1], [0, 0, 1, 1], [], []>} : vector<2x128xbf16>, vector<128x512xbf16>, vector<2x512xf32> -> vector<2x512xf32>
    %198 = arith.addf %195, %197 : vector<2x512xf32>
    %199 = vector.extract_strided_slice %198 {offsets = [0, 0], sizes = [2, 128], strides = [1, 1]} : vector<2x512xf32> to vector<2x128xf32>
    %200 = arith.negf %199 : vector<2x128xf32>
    %201 = math.exp %200 : vector<2x128xf32>
    %cst_61 = arith.constant 1.000000e+00 : f32
    %202 = vector.broadcast %cst_61 : f32 to vector<2x128xf32>
    %203 = arith.addf %202, %201 : vector<2x128xf32>
    %204 = arith.divf %202, %203 : vector<2x128xf32>
    %205 = vector.extract_strided_slice %198 {offsets = [0, 128], sizes = [2, 128], strides = [1, 1]} : vector<2x512xf32> to vector<2x128xf32>
    %206 = arith.negf %205 : vector<2x128xf32>
    %207 = math.exp %206 : vector<2x128xf32>
    %cst_62 = arith.constant 1.000000e+00 : f32
    %208 = vector.broadcast %cst_62 : f32 to vector<2x128xf32>
    %209 = arith.addf %208, %207 : vector<2x128xf32>
    %210 = arith.divf %208, %209 : vector<2x128xf32>
    %211 = vector.extract_strided_slice %198 {offsets = [0, 256], sizes = [2, 128], strides = [1, 1]} : vector<2x512xf32> to vector<2x128xf32>
    %212 = math.tanh %211 : vector<2x128xf32>
    %213 = vector.extract_strided_slice %198 {offsets = [0, 384], sizes = [2, 128], strides = [1, 1]} : vector<2x512xf32> to vector<2x128xf32>
    %214 = arith.negf %213 : vector<2x128xf32>
    %215 = math.exp %214 : vector<2x128xf32>
    %cst_63 = arith.constant 1.000000e+00 : f32
    %216 = vector.broadcast %cst_63 : f32 to vector<2x128xf32>
    %217 = arith.addf %216, %215 : vector<2x128xf32>
    %218 = arith.divf %216, %217 : vector<2x128xf32>
    %219 = arith.mulf %210, %190 : vector<2x128xf32>
    %220 = arith.mulf %204, %212 : vector<2x128xf32>
    %221 = arith.addf %219, %220 : vector<2x128xf32>
    %222 = math.tanh %221 : vector<2x128xf32>
    %223 = arith.mulf %218, %222 : vector<2x128xf32>
    %c4_64 = arith.constant 4 : index
    %c0_65 = arith.constant 0 : index
    %c0_66 = arith.constant 0 : index
    %224 = vector.load %arg3[%c4_64, %c0_65, %c0_66] : memref<8x2x1xf32, #tpu.memory_space<vmem>>, vector<1x2x1xf32>
    %225 = vector.shape_cast %224 : vector<1x2x1xf32> to vector<2x1xf32>
    %cst_67 = arith.constant 1.000000e+00 : f32
    %226 = vector.broadcast %cst_67 : f32 to vector<2x1xf32>
    %227 = arith.subf %226, %225 : vector<2x1xf32>
    %228 = vector.broadcast %225 : vector<2x1xf32> to vector<2x128xf32>
    %229 = arith.mulf %223, %228 : vector<2x128xf32>
    %230 = vector.broadcast %227 : vector<2x1xf32> to vector<2x128xf32>
    %231 = arith.mulf %185, %230 : vector<2x128xf32>
    %232 = arith.addf %229, %231 : vector<2x128xf32>
    %233 = vector.broadcast %225 : vector<2x1xf32> to vector<2x128xf32>
    %234 = arith.mulf %221, %233 : vector<2x128xf32>
    %235 = vector.broadcast %227 : vector<2x1xf32> to vector<2x128xf32>
    %236 = arith.mulf %190, %235 : vector<2x128xf32>
    %237 = arith.addf %234, %236 : vector<2x128xf32>
    %c4_68 = arith.constant 4 : index
    %c0_69 = arith.constant 0 : index
    %c0_70 = arith.constant 0 : index
    %238 = vector.load %arg7[%c4_68, %c0_69, %c0_70] : memref<8x2x128xf32, #tpu.memory_space<vmem>>, vector<1x2x128xf32>
    %239 = vector.shape_cast %238 : vector<1x2x128xf32> to vector<2x128xf32>
    %240 = vector.shape_cast %232 : vector<2x128xf32> to vector<1x2x128xf32>
    tpu.vector_store %arg7[%c4_68, %c0_69, %c0_70], %240 {strides = array<i32>} : memref<8x2x128xf32, #tpu.memory_space<vmem>>, vector<1x2x128xf32>,
    %c5 = arith.constant 5 : index
    %c0_71 = arith.constant 0 : index
    %c0_72 = arith.constant 0 : index
    %241 = vector.load %arg2[%c5, %c0_71, %c0_72] : memref<8x2x512xf32, #tpu.memory_space<vmem>>, vector<1x2x512xf32>
    %242 = vector.shape_cast %241 : vector<1x2x512xf32> to vector<2x512xf32>
    %243 = arith.truncf %232 : vector<2x128xf32> to vector<2x128xbf16>
    %cst_73 = arith.constant dense<0.000000e+00> : vector<2x512xf32>
    %244 = tpu.matmul %243, %5, %cst_73 {dimension_numbers = #tpu.dot_dimension_numbers<[1], [0], [0], [1], [0, 0, 1, 1], [], []>} : vector<2x128xbf16>, vector<128x512xbf16>, vector<2x512xf32> -> vector<2x512xf32>
    %245 = arith.addf %242, %244 : vector<2x512xf32>
    %246 = vector.extract_strided_slice %245 {offsets = [0, 0], sizes = [2, 128], strides = [1, 1]} : vector<2x512xf32> to vector<2x128xf32>
    %247 = arith.negf %246 : vector<2x128xf32>
    %248 = math.exp %247 : vector<2x128xf32>
    %cst_74 = arith.constant 1.000000e+00 : f32
    %249 = vector.broadcast %cst_74 : f32 to vector<2x128xf32>
    %250 = arith.addf %249, %248 : vector<2x128xf32>
    %251 = arith.divf %249, %250 : vector<2x128xf32>
    %252 = vector.extract_strided_slice %245 {offsets = [0, 128], sizes = [2, 128], strides = [1, 1]} : vector<2x512xf32> to vector<2x128xf32>
    %253 = arith.negf %252 : vector<2x128xf32>
    %254 = math.exp %253 : vector<2x128xf32>
    %cst_75 = arith.constant 1.000000e+00 : f32
    %255 = vector.broadcast %cst_75 : f32 to vector<2x128xf32>
    %256 = arith.addf %255, %254 : vector<2x128xf32>
    %257 = arith.divf %255, %256 : vector<2x128xf32>
    %258 = vector.extract_strided_slice %245 {offsets = [0, 256], sizes = [2, 128], strides = [1, 1]} : vector<2x512xf32> to vector<2x128xf32>
    %259 = math.tanh %258 : vector<2x128xf32>
    %260 = vector.extract_strided_slice %245 {offsets = [0, 384], sizes = [2, 128], strides = [1, 1]} : vector<2x512xf32> to vector<2x128xf32>
    %261 = arith.negf %260 : vector<2x128xf32>
    %262 = math.exp %261 : vector<2x128xf32>
    %cst_76 = arith.constant 1.000000e+00 : f32
    %263 = vector.broadcast %cst_76 : f32 to vector<2x128xf32>
    %264 = arith.addf %263, %262 : vector<2x128xf32>
    %265 = arith.divf %263, %264 : vector<2x128xf32>
    %266 = arith.mulf %257, %237 : vector<2x128xf32>
    %267 = arith.mulf %251, %259 : vector<2x128xf32>
    %268 = arith.addf %266, %267 : vector<2x128xf32>
    %269 = math.tanh %268 : vector<2x128xf32>
    %270 = arith.mulf %265, %269 : vector<2x128xf32>
    %c5_77 = arith.constant 5 : index
    %c0_78 = arith.constant 0 : index
    %c0_79 = arith.constant 0 : index
    %271 = vector.load %arg3[%c5_77, %c0_78, %c0_79] : memref<8x2x1xf32, #tpu.memory_space<vmem>>, vector<1x2x1xf32>
    %272 = vector.shape_cast %271 : vector<1x2x1xf32> to vector<2x1xf32>
    %cst_80 = arith.constant 1.000000e+00 : f32
    %273 = vector.broadcast %cst_80 : f32 to vector<2x1xf32>
    %274 = arith.subf %273, %272 : vector<2x1xf32>
    %275 = vector.broadcast %272 : vector<2x1xf32> to vector<2x128xf32>
    %276 = arith.mulf %270, %275 : vector<2x128xf32>
    %277 = vector.broadcast %274 : vector<2x1xf32> to vector<2x128xf32>
    %278 = arith.mulf %232, %277 : vector<2x128xf32>
    %279 = arith.addf %276, %278 : vector<2x128xf32>
    %280 = vector.broadcast %272 : vector<2x1xf32> to vector<2x128xf32>
    %281 = arith.mulf %268, %280 : vector<2x128xf32>
    %282 = vector.broadcast %274 : vector<2x1xf32> to vector<2x128xf32>
    %283 = arith.mulf %237, %282 : vector<2x128xf32>
    %284 = arith.addf %281, %283 : vector<2x128xf32>
    %c5_81 = arith.constant 5 : index
    %c0_82 = arith.constant 0 : index
    %c0_83 = arith.constant 0 : index
    %285 = vector.load %arg7[%c5_81, %c0_82, %c0_83] : memref<8x2x128xf32, #tpu.memory_space<vmem>>, vector<1x2x128xf32>
    %286 = vector.shape_cast %285 : vector<1x2x128xf32> to vector<2x128xf32>
    %287 = vector.shape_cast %279 : vector<2x128xf32> to vector<1x2x128xf32>
    tpu.vector_store %arg7[%c5_81, %c0_82, %c0_83], %287 {strides = array<i32>} : memref<8x2x128xf32, #tpu.memory_space<vmem>>, vector<1x2x128xf32>,
    %c6 = arith.constant 6 : index
    %c0_84 = arith.constant 0 : index
    %c0_85 = arith.constant 0 : index
    %288 = vector.load %arg2[%c6, %c0_84, %c0_85] : memref<8x2x512xf32, #tpu.memory_space<vmem>>, vector<1x2x512xf32>
    %289 = vector.shape_cast %288 : vector<1x2x512xf32> to vector<2x512xf32>
    %290 = arith.truncf %279 : vector<2x128xf32> to vector<2x128xbf16>
    %cst_86 = arith.constant dense<0.000000e+00> : vector<2x512xf32>
    %291 = tpu.matmul %290, %5, %cst_86 {dimension_numbers = #tpu.dot_dimension_numbers<[1], [0], [0], [1], [0, 0, 1, 1], [], []>} : vector<2x128xbf16>, vector<128x512xbf16>, vector<2x512xf32> -> vector<2x512xf32>
    %292 = arith.addf %289, %291 : vector<2x512xf32>
    %293 = vector.extract_strided_slice %292 {offsets = [0, 0], sizes = [2, 128], strides = [1, 1]} : vector<2x512xf32> to vector<2x128xf32>
    %294 = arith.negf %293 : vector<2x128xf32>
    %295 = math.exp %294 : vector<2x128xf32>
    %cst_87 = arith.constant 1.000000e+00 : f32
    %296 = vector.broadcast %cst_87 : f32 to vector<2x128xf32>
    %297 = arith.addf %296, %295 : vector<2x128xf32>
    %298 = arith.divf %296, %297 : vector<2x128xf32>
    %299 = vector.extract_strided_slice %292 {offsets = [0, 128], sizes = [2, 128], strides = [1, 1]} : vector<2x512xf32> to vector<2x128xf32>
    %300 = arith.negf %299 : vector<2x128xf32>
    %301 = math.exp %300 : vector<2x128xf32>
    %cst_88 = arith.constant 1.000000e+00 : f32
    %302 = vector.broadcast %cst_88 : f32 to vector<2x128xf32>
    %303 = arith.addf %302, %301 : vector<2x128xf32>
    %304 = arith.divf %302, %303 : vector<2x128xf32>
    %305 = vector.extract_strided_slice %292 {offsets = [0, 256], sizes = [2, 128], strides = [1, 1]} : vector<2x512xf32> to vector<2x128xf32>
    %306 = math.tanh %305 : vector<2x128xf32>
    %307 = vector.extract_strided_slice %292 {offsets = [0, 384], sizes = [2, 128], strides = [1, 1]} : vector<2x512xf32> to vector<2x128xf32>
    %308 = arith.negf %307 : vector<2x128xf32>
    %309 = math.exp %308 : vector<2x128xf32>
    %cst_89 = arith.constant 1.000000e+00 : f32
    %310 = vector.broadcast %cst_89 : f32 to vector<2x128xf32>
    %311 = arith.addf %310, %309 : vector<2x128xf32>
    %312 = arith.divf %310, %311 : vector<2x128xf32>
    %313 = arith.mulf %304, %284 : vector<2x128xf32>
    %314 = arith.mulf %298, %306 : vector<2x128xf32>
    %315 = arith.addf %313, %314 : vector<2x128xf32>
    %316 = math.tanh %315 : vector<2x128xf32>
    %317 = arith.mulf %312, %316 : vector<2x128xf32>
    %c6_90 = arith.constant 6 : index
    %c0_91 = arith.constant 0 : index
    %c0_92 = arith.constant 0 : index
    %318 = vector.load %arg3[%c6_90, %c0_91, %c0_92] : memref<8x2x1xf32, #tpu.memory_space<vmem>>, vector<1x2x1xf32>
    %319 = vector.shape_cast %318 : vector<1x2x1xf32> to vector<2x1xf32>
    %cst_93 = arith.constant 1.000000e+00 : f32
    %320 = vector.broadcast %cst_93 : f32 to vector<2x1xf32>
    %321 = arith.subf %320, %319 : vector<2x1xf32>
    %322 = vector.broadcast %319 : vector<2x1xf32> to vector<2x128xf32>
    %323 = arith.mulf %317, %322 : vector<2x128xf32>
    %324 = vector.broadcast %321 : vector<2x1xf32> to vector<2x128xf32>
    %325 = arith.mulf %279, %324 : vector<2x128xf32>
    %326 = arith.addf %323, %325 : vector<2x128xf32>
    %327 = vector.broadcast %319 : vector<2x1xf32> to vector<2x128xf32>
    %328 = arith.mulf %315, %327 : vector<2x128xf32>
    %329 = vector.broadcast %321 : vector<2x1xf32> to vector<2x128xf32>
    %330 = arith.mulf %284, %329 : vector<2x128xf32>
    %331 = arith.addf %328, %330 : vector<2x128xf32>
    %c6_94 = arith.constant 6 : index
    %c0_95 = arith.constant 0 : index
    %c0_96 = arith.constant 0 : index
    %332 = vector.load %arg7[%c6_94, %c0_95, %c0_96] : memref<8x2x128xf32, #tpu.memory_space<vmem>>, vector<1x2x128xf32>
    %333 = vector.shape_cast %332 : vector<1x2x128xf32> to vector<2x128xf32>
    %334 = vector.shape_cast %326 : vector<2x128xf32> to vector<1x2x128xf32>
    tpu.vector_store %arg7[%c6_94, %c0_95, %c0_96], %334 {strides = array<i32>} : memref<8x2x128xf32, #tpu.memory_space<vmem>>, vector<1x2x128xf32>,
    %c7 = arith.constant 7 : index
    %c0_97 = arith.constant 0 : index
    %c0_98 = arith.constant 0 : index
    %335 = vector.load %arg2[%c7, %c0_97, %c0_98] : memref<8x2x512xf32, #tpu.memory_space<vmem>>, vector<1x2x512xf32>
    %336 = vector.shape_cast %335 : vector<1x2x512xf32> to vector<2x512xf32>
    %337 = arith.truncf %326 : vector<2x128xf32> to vector<2x128xbf16>
    %cst_99 = arith.constant dense<0.000000e+00> : vector<2x512xf32>
    %338 = tpu.matmul %337, %5, %cst_99 {dimension_numbers = #tpu.dot_dimension_numbers<[1], [0], [0], [1], [0, 0, 1, 1], [], []>} : vector<2x128xbf16>, vector<128x512xbf16>, vector<2x512xf32> -> vector<2x512xf32>
    %339 = arith.addf %336, %338 : vector<2x512xf32>
    %340 = vector.extract_strided_slice %339 {offsets = [0, 0], sizes = [2, 128], strides = [1, 1]} : vector<2x512xf32> to vector<2x128xf32>
    %341 = arith.negf %340 : vector<2x128xf32>
    %342 = math.exp %341 : vector<2x128xf32>
    %cst_100 = arith.constant 1.000000e+00 : f32
    %343 = vector.broadcast %cst_100 : f32 to vector<2x128xf32>
    %344 = arith.addf %343, %342 : vector<2x128xf32>
    %345 = arith.divf %343, %344 : vector<2x128xf32>
    %346 = vector.extract_strided_slice %339 {offsets = [0, 128], sizes = [2, 128], strides = [1, 1]} : vector<2x512xf32> to vector<2x128xf32>
    %347 = arith.negf %346 : vector<2x128xf32>
    %348 = math.exp %347 : vector<2x128xf32>
    %cst_101 = arith.constant 1.000000e+00 : f32
    %349 = vector.broadcast %cst_101 : f32 to vector<2x128xf32>
    %350 = arith.addf %349, %348 : vector<2x128xf32>
    %351 = arith.divf %349, %350 : vector<2x128xf32>
    %352 = vector.extract_strided_slice %339 {offsets = [0, 256], sizes = [2, 128], strides = [1, 1]} : vector<2x512xf32> to vector<2x128xf32>
    %353 = math.tanh %352 : vector<2x128xf32>
    %354 = vector.extract_strided_slice %339 {offsets = [0, 384], sizes = [2, 128], strides = [1, 1]} : vector<2x512xf32> to vector<2x128xf32>
    %355 = arith.negf %354 : vector<2x128xf32>
    %356 = math.exp %355 : vector<2x128xf32>
    %cst_102 = arith.constant 1.000000e+00 : f32
    %357 = vector.broadcast %cst_102 : f32 to vector<2x128xf32>
    %358 = arith.addf %357, %356 : vector<2x128xf32>
    %359 = arith.divf %357, %358 : vector<2x128xf32>
    %360 = arith.mulf %351, %331 : vector<2x128xf32>
    %361 = arith.mulf %345, %353 : vector<2x128xf32>
    %362 = arith.addf %360, %361 : vector<2x128xf32>
    %363 = math.tanh %362 : vector<2x128xf32>
    %364 = arith.mulf %359, %363 : vector<2x128xf32>
    %c7_103 = arith.constant 7 : index
    %c0_104 = arith.constant 0 : index
    %c0_105 = arith.constant 0 : index
    %365 = vector.load %arg3[%c7_103, %c0_104, %c0_105] : memref<8x2x1xf32, #tpu.memory_space<vmem>>, vector<1x2x1xf32>
    %366 = vector.shape_cast %365 : vector<1x2x1xf32> to vector<2x1xf32>
    %cst_106 = arith.constant 1.000000e+00 : f32
    %367 = vector.broadcast %cst_106 : f32 to vector<2x1xf32>
    %368 = arith.subf %367, %366 : vector<2x1xf32>
    %369 = vector.broadcast %366 : vector<2x1xf32> to vector<2x128xf32>
    %370 = arith.mulf %364, %369 : vector<2x128xf32>
    %371 = vector.broadcast %368 : vector<2x1xf32> to vector<2x128xf32>
    %372 = arith.mulf %326, %371 : vector<2x128xf32>
    %373 = arith.addf %370, %372 : vector<2x128xf32>
    %374 = vector.broadcast %366 : vector<2x1xf32> to vector<2x128xf32>
    %375 = arith.mulf %362, %374 : vector<2x128xf32>
    %376 = vector.broadcast %368 : vector<2x1xf32> to vector<2x128xf32>
    %377 = arith.mulf %331, %376 : vector<2x128xf32>
    %378 = arith.addf %375, %377 : vector<2x128xf32>
    %c7_107 = arith.constant 7 : index
    %c0_108 = arith.constant 0 : index
    %c0_109 = arith.constant 0 : index
    %379 = vector.load %arg7[%c7_107, %c0_108, %c0_109] : memref<8x2x128xf32, #tpu.memory_space<vmem>>, vector<1x2x128xf32>
    %380 = vector.shape_cast %379 : vector<1x2x128xf32> to vector<2x128xf32>
    %381 = vector.shape_cast %373 : vector<2x128xf32> to vector<1x2x128xf32>
    tpu.vector_store %arg7[%c7_107, %c0_108, %c0_109], %381 {strides = array<i32>} : memref<8x2x128xf32, #tpu.memory_space<vmem>>, vector<1x2x128xf32>,
    %c0_110 = arith.constant 0 : index
    %c0_111 = arith.constant 0 : index
    %382 = vector.load %arg8[%c0_110, %c0_111] : memref<2x128xf32, #tpu.memory_space<vmem>>, vector<2x128xf32>
    tpu.vector_store %arg8[%c0_110, %c0_111], %373 {strides = array<i32>} : memref<2x128xf32, #tpu.memory_space<vmem>>, vector<2x128xf32>,
    %c0_112 = arith.constant 0 : index
    %c0_113 = arith.constant 0 : index
    %383 = vector.load %arg9[%c0_112, %c0_113] : memref<2x128xf32, #tpu.memory_space<vmem>>, vector<2x128xf32>
    tpu.vector_store %arg9[%c0_112, %c0_113], %378 {strides = array<i32>} : memref<2x128xf32, #tpu.memory_space<vmem>>, vector<2x128xf32>,
    return
  }
  func.func @transform_0(%arg0: i32, %arg1: i32) -> (i32, i32, i32) {
    %c0_i32 = arith.constant 0 : i32
    %c0_i32_0 = arith.constant 0 : i32
    return %arg1, %arg0, %c0_i32 : i32, i32, i32
  }
  func.func @transform_1(%arg0: i32, %arg1: i32) -> (i32, i32, i32) {
    %c0_i32 = arith.constant 0 : i32
    %c0_i32_0 = arith.constant 0 : i32
    return %arg1, %arg0, %c0_i32 : i32, i32, i32
  }
  func.func @transform_2(%arg0: i32, %arg1: i32) -> (i32, i32) {
    %c0_i32 = arith.constant 0 : i32
    %c0_i32_0 = arith.constant 0 : i32
    %c0_i32_1 = arith.constant 0 : i32
    return %c0_i32, %c0_i32_0 : i32, i32
  }
  func.func @transform_3(%arg0: i32, %arg1: i32) -> (i32, i32) {
    %c0_i32 = arith.constant 0 : i32
    %c0_i32_0 = arith.constant 0 : i32
    %c0_i32_1 = arith.constant 0 : i32
    return %c0_i32, %c0_i32_0 : i32, i32
  }
  func.func @transform_4(%arg0: i32, %arg1: i32) -> (i32, i32) {
    %c0_i32 = arith.constant 0 : i32
    %c0_i32_0 = arith.constant 0 : i32
    %c0_i32_1 = arith.constant 0 : i32
    return %c0_i32, %c0_i32_0 : i32, i32
  }
  func.func @transform_5(%arg0: i32, %arg1: i32) -> (i32, i32, i32) {
    %c0_i32 = arith.constant 0 : i32
    %c0_i32_0 = arith.constant 0 : i32
    return %arg1, %arg0, %c0_i32 : i32, i32, i32
  }
}

module attributes {stable_mosaic.version = 11 : i64} {
  func.func @_input_proj_kernel(%arg0: i32, %arg1: memref<16x16xbf16, #tpu.memory_space<vmem>>, %arg2: memref<16x512xbf16, #tpu.memory_space<vmem>>, %arg3: memref<1x512xf32, #tpu.memory_space<vmem>>, %arg4: memref<16x512xf32, #tpu.memory_space<vmem>>) attributes {dimension_semantics = [#tpu.dimension_semantics<parallel>], iteration_bounds = array<i64: 1>, scalar_prefetch = 0 : i64, scratch_operands = 0 : i64, tpu.core_type = #tpu.core_type<tc>, window_params = [{transform_indices = @transform_0, window_bounds = array<i64: 16, 16>}, {pipeline_mode = #tpu.pipeline_mode<synchronous>, transform_indices = @transform_1, window_bounds = array<i64: 16, 512>}, {pipeline_mode = #tpu.pipeline_mode<synchronous>, transform_indices = @transform_2, window_bounds = array<i64: 1, 512>}, {transform_indices = @transform_3, window_bounds = array<i64: 16, 512>}]} {
    %c0 = arith.constant 0 : index
    %c0_0 = arith.constant 0 : index
    %0 = vector.load %arg1[%c0, %c0_0] : memref<16x16xbf16, #tpu.memory_space<vmem>>, vector<16x16xbf16>
    %c0_1 = arith.constant 0 : index
    %c0_2 = arith.constant 0 : index
    %1 = vector.load %arg2[%c0_1, %c0_2] : memref<16x512xbf16, #tpu.memory_space<vmem>>, vector<16x512xbf16>
    %cst = arith.constant dense<0.000000e+00> : vector<16x512xf32>
    %2 = tpu.matmul %0, %1, %cst {dimension_numbers = #tpu.dot_dimension_numbers<[1], [0], [0], [1], [0, 0, 1, 1], [], []>} : vector<16x16xbf16>, vector<16x512xbf16>, vector<16x512xf32> -> vector<16x512xf32>
    %c0_3 = arith.constant 0 : index
    %c0_4 = arith.constant 0 : index
    %3 = vector.load %arg3[%c0_3, %c0_4] : memref<1x512xf32, #tpu.memory_space<vmem>>, vector<1x512xf32>
    %4 = vector.broadcast %3 : vector<1x512xf32> to vector<16x512xf32>
    %5 = arith.addf %2, %4 : vector<16x512xf32>
    %c0_5 = arith.constant 0 : index
    %c0_6 = arith.constant 0 : index
    %6 = vector.load %arg4[%c0_5, %c0_6] : memref<16x512xf32, #tpu.memory_space<vmem>>, vector<16x512xf32>
    tpu.vector_store %arg4[%c0_5, %c0_6], %5 {strides = array<i32>} : memref<16x512xf32, #tpu.memory_space<vmem>>, vector<16x512xf32>,
    return
  }
  func.func @transform_0(%arg0: i32) -> (i32, i32) {
    %c0_i32 = arith.constant 0 : i32
    %c0_i32_0 = arith.constant 0 : i32
    return %arg0, %c0_i32 : i32, i32
  }
  func.func @transform_1(%arg0: i32) -> (i32, i32) {
    %c0_i32 = arith.constant 0 : i32
    %c0_i32_0 = arith.constant 0 : i32
    %c0_i32_1 = arith.constant 0 : i32
    return %c0_i32, %c0_i32_0 : i32, i32
  }
  func.func @transform_2(%arg0: i32) -> (i32, i32) {
    %c0_i32 = arith.constant 0 : i32
    %c0_i32_0 = arith.constant 0 : i32
    %c0_i32_1 = arith.constant 0 : i32
    return %c0_i32, %c0_i32_0 : i32, i32
  }
  func.func @transform_3(%arg0: i32) -> (i32, i32) {
    %c0_i32 = arith.constant 0 : i32
    %c0_i32_0 = arith.constant 0 : i32
    return %arg0, %c0_i32 : i32, i32
  }
}

module attributes {stable_mosaic.version = 11 : i64} {
  func.func @_linear_tanh_kernel(%arg0: i32, %arg1: memref<16x128xf32, #tpu.memory_space<vmem>>, %arg2: memref<128x32xbf16, #tpu.memory_space<vmem>>, %arg3: memref<128x32xbf16, #tpu.memory_space<vmem>>, %arg4: memref<1x32xf32, #tpu.memory_space<vmem>>, %arg5: memref<1x32xf32, #tpu.memory_space<vmem>>, %arg6: memref<16x32xf32, #tpu.memory_space<vmem>>, %arg7: memref<16x32xf32, #tpu.memory_space<vmem>>) attributes {dimension_semantics = [#tpu.dimension_semantics<parallel>], iteration_bounds = array<i64: 1>, scalar_prefetch = 0 : i64, scratch_operands = 0 : i64, tpu.core_type = #tpu.core_type<tc>, window_params = [{transform_indices = @transform_0, window_bounds = array<i64: 16, 128>}, {pipeline_mode = #tpu.pipeline_mode<synchronous>, transform_indices = @transform_1, window_bounds = array<i64: 128, 32>}, {pipeline_mode = #tpu.pipeline_mode<synchronous>, transform_indices = @transform_2, window_bounds = array<i64: 128, 32>}, {pipeline_mode = #tpu.pipeline_mode<synchronous>, transform_indices = @transform_3, window_bounds = array<i64: 1, 32>}, {pipeline_mode = #tpu.pipeline_mode<synchronous>, transform_indices = @transform_4, window_bounds = array<i64: 1, 32>}, {transform_indices = @transform_5, window_bounds = array<i64: 16, 32>}, {transform_indices = @transform_6, window_bounds = array<i64: 16, 32>}]} {
    %c0 = arith.constant 0 : index
    %c0_0 = arith.constant 0 : index
    %0 = vector.load %arg1[%c0, %c0_0] : memref<16x128xf32, #tpu.memory_space<vmem>>, vector<16x128xf32>
    %1 = arith.truncf %0 : vector<16x128xf32> to vector<16x128xbf16>
    %c0_1 = arith.constant 0 : index
    %c0_2 = arith.constant 0 : index
    %2 = vector.load %arg2[%c0_1, %c0_2] : memref<128x32xbf16, #tpu.memory_space<vmem>>, vector<128x32xbf16>
    %cst = arith.constant dense<0.000000e+00> : vector<16x32xf32>
    %3 = tpu.matmul %1, %2, %cst {dimension_numbers = #tpu.dot_dimension_numbers<[1], [0], [0], [1], [0, 0, 1, 1], [], []>} : vector<16x128xbf16>, vector<128x32xbf16>, vector<16x32xf32> -> vector<16x32xf32>
    %c0_3 = arith.constant 0 : index
    %c0_4 = arith.constant 0 : index
    %4 = vector.load %arg4[%c0_3, %c0_4] : memref<1x32xf32, #tpu.memory_space<vmem>>, vector<1x32xf32>
    %5 = vector.broadcast %4 : vector<1x32xf32> to vector<16x32xf32>
    %6 = arith.addf %3, %5 : vector<16x32xf32>
    %7 = math.tanh %6 : vector<16x32xf32>
    %c0_5 = arith.constant 0 : index
    %c0_6 = arith.constant 0 : index
    %8 = vector.load %arg6[%c0_5, %c0_6] : memref<16x32xf32, #tpu.memory_space<vmem>>, vector<16x32xf32>
    tpu.vector_store %arg6[%c0_5, %c0_6], %7 {strides = array<i32>} : memref<16x32xf32, #tpu.memory_space<vmem>>, vector<16x32xf32>,
    %c0_7 = arith.constant 0 : index
    %c0_8 = arith.constant 0 : index
    %9 = vector.load %arg3[%c0_7, %c0_8] : memref<128x32xbf16, #tpu.memory_space<vmem>>, vector<128x32xbf16>
    %cst_9 = arith.constant dense<0.000000e+00> : vector<16x32xf32>
    %10 = tpu.matmul %1, %9, %cst_9 {dimension_numbers = #tpu.dot_dimension_numbers<[1], [0], [0], [1], [0, 0, 1, 1], [], []>} : vector<16x128xbf16>, vector<128x32xbf16>, vector<16x32xf32> -> vector<16x32xf32>
    %c0_10 = arith.constant 0 : index
    %c0_11 = arith.constant 0 : index
    %11 = vector.load %arg5[%c0_10, %c0_11] : memref<1x32xf32, #tpu.memory_space<vmem>>, vector<1x32xf32>
    %12 = vector.broadcast %11 : vector<1x32xf32> to vector<16x32xf32>
    %13 = arith.addf %10, %12 : vector<16x32xf32>
    %14 = math.tanh %13 : vector<16x32xf32>
    %c0_12 = arith.constant 0 : index
    %c0_13 = arith.constant 0 : index
    %15 = vector.load %arg7[%c0_12, %c0_13] : memref<16x32xf32, #tpu.memory_space<vmem>>, vector<16x32xf32>
    tpu.vector_store %arg7[%c0_12, %c0_13], %14 {strides = array<i32>} : memref<16x32xf32, #tpu.memory_space<vmem>>, vector<16x32xf32>,
    return
  }
  func.func @transform_0(%arg0: i32) -> (i32, i32) {
    %c0_i32 = arith.constant 0 : i32
    %c0_i32_0 = arith.constant 0 : i32
    return %arg0, %c0_i32 : i32, i32
  }
  func.func @transform_1(%arg0: i32) -> (i32, i32) {
    %c0_i32 = arith.constant 0 : i32
    %c0_i32_0 = arith.constant 0 : i32
    %c0_i32_1 = arith.constant 0 : i32
    return %c0_i32, %c0_i32_0 : i32, i32
  }
  func.func @transform_2(%arg0: i32) -> (i32, i32) {
    %c0_i32 = arith.constant 0 : i32
    %c0_i32_0 = arith.constant 0 : i32
    %c0_i32_1 = arith.constant 0 : i32
    return %c0_i32, %c0_i32_0 : i32, i32
  }
  func.func @transform_3(%arg0: i32) -> (i32, i32) {
    %c0_i32 = arith.constant 0 : i32
    %c0_i32_0 = arith.constant 0 : i32
    %c0_i32_1 = arith.constant 0 : i32
    return %c0_i32, %c0_i32_0 : i32, i32
  }
  func.func @transform_4(%arg0: i32) -> (i32, i32) {
    %c0_i32 = arith.constant 0 : i32
    %c0_i32_0 = arith.constant 0 : i32
    %c0_i32_1 = arith.constant 0 : i32
    return %c0_i32, %c0_i32_0 : i32, i32
  }
  func.func @transform_5(%arg0: i32) -> (i32, i32) {
    %c0_i32 = arith.constant 0 : i32
    %c0_i32_0 = arith.constant 0 : i32
    return %arg0, %c0_i32 : i32, i32
  }
  func.func @transform_6(%arg0: i32) -> (i32, i32) {
    %c0_i32 = arith.constant 0 : i32
    %c0_i32_0 = arith.constant 0 : i32
    return %arg0, %c0_i32 : i32, i32
  }
}

</mosaic_0001>

<llo_original>
// kernel: transform_leafs.3
$region0: #{transform_leafs.3}
  #allocation0 [shape = 'u32[]', space=smem, size = 0x4, offset = 0x4, fixed_abs, tag = 'smem constant byte address 0x4 - core index']
  #allocation1 [shape = 'u32[72,128]{1,0:T(1,128)}', space=vmem, size = 0x9000, scoped, tag = 'internal scratch']
  %s0 = inlined_call_operand.vmem [shape: bf16[16,16], index: 0, kind: input, shape index: {}]
  %s1 = inlined_call_operand.vmem [shape: bf16[16,512], index: 1, kind: input, shape index: {}]
  %s2 = inlined_call_operand.vmem [shape: f32[1,512], index: 2, kind: input, shape index: {}]
  %s3 = inlined_call_operand.vmem [shape: f32[16,512], index: 3, kind: output, shape index: {}]
  %s4 = sld [smem:[#allocation0]]
  $region22: #{transform_leafs.3} parent=0
    _
  %s6 = ssub.s32 1, %s4
  %s7 = scalar_select 0, %s6, %s4
  // Predicated region
  $region2: #{transform_leafs.3} parent=0 // pred_check
    _
  $region3: #{transform_leafs.3} parent=0 // pred_check_branch
    %9 = sbr.rel (0) target = $region5
  $region4: #{transform_leafs.3} parent=0 // pred_region
    _
  $region5: #{transform_leafs.3} parent=0 // pred_fallthru
    _
  // Predicated region
  $region6: #{transform_leafs.3} parent=0 // pred_check
    _
  $region7: #{transform_leafs.3} parent=0 // pred_check_branch
    %11 = sbr.rel (0) target = $region9
  $region8: #{transform_leafs.3} parent=0 // pred_region
    _
  $region9: #{transform_leafs.3} parent=0 // pred_fallthru
    _
  // Predicated region
  $region10: #{transform_leafs.3} parent=0 // pred_check
    _
  $region11: #{transform_leafs.3} parent=0 // pred_check_branch
    %13 = sbr.rel (0) target = $region13
  $region12: #{transform_leafs.3} parent=0 // pred_region
    _
  $region13: #{transform_leafs.3} parent=0 // pred_fallthru
    _
  %v15 = vld [vmem:[%s0] sm:$0xf]
  %v16 = vld [vmem:[%s0 + $0x4] sm:$0xf]
  %v17 = vld [vmem:[%s1] sm:$0xff]
  %v18 = vld [vmem:[%s1 + $0x8] sm:$0xff]
  %v19 = vld [vmem:[%s1 + $0x10] sm:$0xff]
  %v20 = vld [vmem:[%s1 + $0x18] sm:$0xff]
  %v21 = vld [vmem:[%s2] sm:$0xf]
  %v23 = vperm.slane %v21, 0
  %v24 = vperm.slane %v21, 1
  %v25 = vperm.slane %v21, 2
  %v26 = vperm.slane %v21, 3
  %v33 = vunpack.c.l.b16 %v15
  %v34 = vunpack.c.l.b16 %v16
  %v35 = vpack.c.b16 %v34, %v33
  %v40 = vunpack.c.l.b16 %v17
  %v41 = vunpack.c.h.b16 %v17
  %v42 = vunpack.c.l.b16 %v18
  %v43 = vunpack.c.h.b16 %v18
  %v44 = vunpack.c.l.b16 %v19
  %v45 = vunpack.c.h.b16 %v19
  %v46 = vunpack.c.l.b16 %v20
  %v47 = vunpack.c.h.b16 %v20
  %v48 = vpack.c.b16 %v44, %v40
  %v49 = vpack.c.b16 %v45, %v41
  %v50 = vpack.c.b16 %v46, %v42
  %v51 = vpack.c.b16 %v47, %v43
  %vm56 = vcmask 130048
  %v58 = vsel %vm56, %v35, 0
  %60 = vmatpush.bf16.msra.mxu0 0
  %61 = vmatpush.bf16.msra.mxu0 0
  %62 = vmatpush.bf16.msra.mxu0 0
  %63 = vmatpush.bf16.msra.mxu0 0
  %64 = vmatpush.bf16.msra.mxu0 0
  %65 = vmatpush.bf16.msra.mxu0 0
  %66 = vmatpush.bf16.msra.mxu0 0
  %67 = vmatpush.bf16.msra.mxu0 %v48
  %68 = vmatmul.bf16.gmra.mxu0 %v58
  %v69 = vpop.f32.mrf.mxu0
  %v70 = vadd.f32 %v23, %v69
  %v71 = vpop.f32.mrf.mxu0
  %v72 = vadd.f32 %v23, %v71
  %73 = vdwg.mxu0
  %74 = vmatpush.bf16.msra.mxu0 0
  %75 = vmatpush.bf16.msra.mxu0 0
  %76 = vmatpush.bf16.msra.mxu0 0
  %77 = vmatpush.bf16.msra.mxu0 0
  %78 = vmatpush.bf16.msra.mxu0 0
  %79 = vmatpush.bf16.msra.mxu0 0
  %80 = vmatpush.bf16.msra.mxu0 0
  %81 = vmatpush.bf16.msra.mxu0 %v49
  %82 = vmatmul.bf16.gmra.mxu0 %v58
  %v83 = vpop.f32.mrf.mxu0
  %v84 = vadd.f32 %v24, %v83
  %v85 = vpop.f32.mrf.mxu0
  %v86 = vadd.f32 %v24, %v85
  %87 = vdwg.mxu0
  %88 = vmatpush.bf16.msra.mxu0 0
  %89 = vmatpush.bf16.msra.mxu0 0
  %90 = vmatpush.bf16.msra.mxu0 0
  %91 = vmatpush.bf16.msra.mxu0 0
  %92 = vmatpush.bf16.msra.mxu0 0
  %93 = vmatpush.bf16.msra.mxu0 0
  %94 = vmatpush.bf16.msra.mxu0 0
  %95 = vmatpush.bf16.msra.mxu0 %v50
  %96 = vmatmul.bf16.gmra.mxu0 %v58
  %v97 = vpop.f32.mrf.mxu0
  %v98 = vadd.f32 %v25, %v97
  %v99 = vpop.f32.mrf.mxu0
  %v100 = vadd.f32 %v25, %v99
  %101 = vdwg.mxu0
  %102 = vmatpush.bf16.msra.mxu0 0
  %103 = vmatpush.bf16.msra.mxu0 0
  %104 = vmatpush.bf16.msra.mxu0 0
  %105 = vmatpush.bf16.msra.mxu0 0
  %106 = vmatpush.bf16.msra.mxu0 0
  %107 = vmatpush.bf16.msra.mxu0 0
  %108 = vmatpush.bf16.msra.mxu0 0
  %109 = vmatpush.bf16.msra.mxu0 %v51
  %110 = vmatmul.bf16.gmra.mxu0 %v58
  %v111 = vpop.f32.mrf.mxu0
  %v112 = vadd.f32 %v26, %v111
  %v113 = vpop.f32.mrf.mxu0
  %v114 = vadd.f32 %v26, %v113
  %115 = vdwg.mxu0
  %116 = vst [vmem:[%s3] sm:$0xff] %v70
  %117 = vst [vmem:[%s3 + $0x8] sm:$0xff] %v84
  %118 = vst [vmem:[%s3 + $0x10] sm:$0xff] %v98
  %119 = vst [vmem:[%s3 + $0x18] sm:$0xff] %v112
  %120 = vst [vmem:[%s3 + $0x20] sm:$0xff] %v72
  %121 = vst [vmem:[%s3 + $0x28] sm:$0xff] %v86
  %122 = vst [vmem:[%s3 + $0x30] sm:$0xff] %v100
  %123 = vst [vmem:[%s3 + $0x38] sm:$0xff] %v114
  // Predicated region
  $region14: #{transform_leafs.3} parent=0 // pred_check
    _
  $region15: #{transform_leafs.3} parent=0 // pred_check_branch
    %125 = sbr.rel (0) target = $region17
  $region16: #{transform_leafs.3} parent=0 // pred_region
    _
  $region17: #{transform_leafs.3} parent=0 // pred_fallthru
    _
  // Predicated region
  $region18: #{transform_leafs.3} parent=0 // pred_check
    _
  $region19: #{transform_leafs.3} parent=0 // pred_check_branch
    %127 = sbr.rel (0) target = $region21
  $region20: #{transform_leafs.3} parent=0 // pred_region
    _
  $region21: #{transform_leafs.3} parent=0 // pred_fallthru
    _

// kernel: transform_leafs.5
$region0: #{transform_leafs.5}
  #allocation0 [shape = 'u32[]', space=smem, size = 0x4, offset = 0x4, fixed_abs, tag = 'smem constant byte address 0x4 - core index']
  #allocation1 [shape = 'u32[72,128]{1,0:T(1,128)}', space=vmem, size = 0x9000, scoped, tag = 'internal scratch']
  %s0 = inlined_call_operand.vmem [shape: f32[16,128], index: 0, kind: input, shape index: {}]
  %s1 = inlined_call_operand.vmem [shape: bf16[128,32], index: 1, kind: input, shape index: {}]
  %s2 = inlined_call_operand.vmem [shape: bf16[128,32], index: 2, kind: input, shape index: {}]
  %s3 = inlined_call_operand.vmem [shape: f32[1,32], index: 3, kind: input, shape index: {}]
  %s4 = inlined_call_operand.vmem [shape: f32[1,32], index: 4, kind: input, shape index: {}]
  %s5 = inlined_call_operand.vmem [shape: f32[16,32], index: 5, kind: output, shape index: {0}]
  %s6 = inlined_call_operand.vmem [shape: f32[16,32], index: 6, kind: output, shape index: {1}]
  %7 = xla_tuple %s5, %s6
  %s8 = sld [smem:[#allocation0]]
  $region38: #{transform_leafs.5} parent=0
    _
  %s10 = ssub.s32 1, %s8
  %s11 = scalar_select 0, %s10, %s8
  // Predicated region
  $region2: #{transform_leafs.5} parent=0 // pred_check
    _
  $region3: #{transform_leafs.5} parent=0 // pred_check_branch
    %13 = sbr.rel (0) target = $region5
  $region4: #{transform_leafs.5} parent=0 // pred_region
    _
  $region5: #{transform_leafs.5} parent=0 // pred_fallthru
    _
  // Predicated region
  $region6: #{transform_leafs.5} parent=0 // pred_check
    _
  $region7: #{transform_leafs.5} parent=0 // pred_check_branch
    %15 = sbr.rel (0) target = $region9
  $region8: #{transform_leafs.5} parent=0 // pred_region
    _
  $region9: #{transform_leafs.5} parent=0 // pred_fallthru
    _
  // Predicated region
  $region10: #{transform_leafs.5} parent=0 // pred_check
    _
  $region11: #{transform_leafs.5} parent=0 // pred_check_branch
    %17 = sbr.rel (0) target = $region13
  $region12: #{transform_leafs.5} parent=0 // pred_region
    _
  $region13: #{transform_leafs.5} parent=0 // pred_fallthru
    _
  // Predicated region
  $region14: #{transform_leafs.5} parent=0 // pred_check
    _
  $region15: #{transform_leafs.5} parent=0 // pred_check_branch
    %19 = sbr.rel (0) target = $region17
  $region16: #{transform_leafs.5} parent=0 // pred_region
    _
  $region17: #{transform_leafs.5} parent=0 // pred_fallthru
    _
  // Predicated region
  $region18: #{transform_leafs.5} parent=0 // pred_check
    _
  $region19: #{transform_leafs.5} parent=0 // pred_check_branch
    %21 = sbr.rel (0) target = $region21
  $region20: #{transform_leafs.5} parent=0 // pred_region
    _
  $region21: #{transform_leafs.5} parent=0 // pred_fallthru
    _
  %v22 = vld [vmem:[%s0] sm:$0xff]
  %v23 = vld [vmem:[%s0 + $0x8] sm:$0xff]
  %v24 = vpack.c.bf16 %v23, %v22
  %v25 = vld [vmem:[%s1] sm:$0xf]
  %v26 = vld [vmem:[%s1 + $0x4] sm:$0xf]
  %v27 = vld [vmem:[%s1 + $0x8] sm:$0xf]
  %v28 = vld [vmem:[%s1 + $0xc] sm:$0xf]
  %v29 = vld [vmem:[%s1 + $0x10] sm:$0xf]
  %v30 = vld [vmem:[%s1 + $0x14] sm:$0xf]
  %v31 = vld [vmem:[%s1 + $0x18] sm:$0xf]
  %v32 = vld [vmem:[%s1 + $0x1c] sm:$0xf]
  %v33 = vld [vmem:[%s1 + $0x20] sm:$0xf]
  %v34 = vld [vmem:[%s1 + $0x24] sm:$0xf]
  %v35 = vld [vmem:[%s1 + $0x28] sm:$0xf]
  %v36 = vld [vmem:[%s1 + $0x2c] sm:$0xf]
  %v37 = vld [vmem:[%s1 + $0x30] sm:$0xf]
  %v38 = vld [vmem:[%s1 + $0x34] sm:$0xf]
  %v39 = vld [vmem:[%s1 + $0x38] sm:$0xf]
  %v40 = vld [vmem:[%s1 + $0x3c] sm:$0xf]
  %v41 = vld [vmem:[%s3] sm:$0x1]
  %v43 = vperm.slane %v41, 0
  %v61 = vunpack.c.l.b16 %v25
  %v62 = vunpack.c.l.b16 %v26
  %v63 = vunpack.c.l.b16 %v27
  %v64 = vunpack.c.l.b16 %v28
  %v65 = vunpack.c.l.b16 %v29
  %v66 = vunpack.c.l.b16 %v30
  %v67 = vunpack.c.l.b16 %v31
  %v68 = vunpack.c.l.b16 %v32
  %v69 = vunpack.c.l.b16 %v33
  %v70 = vunpack.c.l.b16 %v34
  %v71 = vunpack.c.l.b16 %v35
  %v72 = vunpack.c.l.b16 %v36
  %v73 = vunpack.c.l.b16 %v37
  %v74 = vunpack.c.l.b16 %v38
  %v75 = vunpack.c.l.b16 %v39
  %v76 = vunpack.c.l.b16 %v40
  %v77 = vpack.c.b16 %v62, %v61
  %v78 = vpack.c.b16 %v64, %v63
  %v79 = vpack.c.b16 %v66, %v65
  %v80 = vpack.c.b16 %v68, %v67
  %v81 = vpack.c.b16 %v70, %v69
  %v82 = vpack.c.b16 %v72, %v71
  %v83 = vpack.c.b16 %v74, %v73
  %v84 = vpack.c.b16 %v76, %v75
  %93 = vmatpush.bf16.msra.mxu0 %v84
  %94 = vmatpush.bf16.msra.mxu0 %v83
  %95 = vmatpush.bf16.msra.mxu0 %v82
  %96 = vmatpush.bf16.msra.mxu0 %v81
  %97 = vmatpush.bf16.msra.mxu0 %v80
  %98 = vmatpush.bf16.msra.mxu0 %v79
  %99 = vmatpush.bf16.msra.mxu0 %v78
  %100 = vmatpush.bf16.msra.mxu0 %v77
  %101 = vmatmul.bf16.gmra.mxu0 %v24
  %v102 = vpop.f32.mrf.mxu0
  %v103 = vadd.f32 %v43, %v102
  %v104 = vpop.f32.mrf.mxu0
  %v105 = vadd.f32 %v43, %v104
  %106 = vdwg.mxu0
  %v107 = vtanh.pop %v103
  %v108 = vtanh.pop %v105
  %vm109 = vcmask 261120
  %110 = vst.msk [vmem:[%s5] sm:$0xff] %vm109, %v107
  %111 = vst.msk [vmem:[%s5 + $0x8] sm:$0xff] %vm109, %v108
  %v112 = vld [vmem:[%s2] sm:$0xf]
  %v113 = vld [vmem:[%s2 + $0x4] sm:$0xf]
  %v114 = vld [vmem:[%s2 + $0x8] sm:$0xf]
  %v115 = vld [vmem:[%s2 + $0xc] sm:$0xf]
  %v116 = vld [vmem:[%s2 + $0x10] sm:$0xf]
  %v117 = vld [vmem:[%s2 + $0x14] sm:$0xf]
  %v118 = vld [vmem:[%s2 + $0x18] sm:$0xf]
  %v119 = vld [vmem:[%s2 + $0x1c] sm:$0xf]
  %v120 = vld [vmem:[%s2 + $0x20] sm:$0xf]
  %v121 = vld [vmem:[%s2 + $0x24] sm:$0xf]
  %v122 = vld [vmem:[%s2 + $0x28] sm:$0xf]
  %v123 = vld [vmem:[%s2 + $0x2c] sm:$0xf]
  %v124 = vld [vmem:[%s2 + $0x30] sm:$0xf]
  %v125 = vld [vmem:[%s2 + $0x34] sm:$0xf]
  %v126 = vld [vmem:[%s2 + $0x38] sm:$0xf]
  %v127 = vld [vmem:[%s2 + $0x3c] sm:$0xf]
  %v128 = vld [vmem:[%s4] sm:$0x1]
  %v130 = vperm.slane %v128, 0
  %v148 = vunpack.c.l.b16 %v112
  %v149 = vunpack.c.l.b16 %v113
  %v150 = vunpack.c.l.b16 %v114
  %v151 = vunpack.c.l.b16 %v115
  %v152 = vunpack.c.l.b16 %v116
  %v153 = vunpack.c.l.b16 %v117
  %v154 = vunpack.c.l.b16 %v118
  %v155 = vunpack.c.l.b16 %v119
  %v156 = vunpack.c.l.b16 %v120
  %v157 = vunpack.c.l.b16 %v121
  %v158 = vunpack.c.l.b16 %v122
  %v159 = vunpack.c.l.b16 %v123
  %v160 = vunpack.c.l.b16 %v124
  %v161 = vunpack.c.l.b16 %v125
  %v162 = vunpack.c.l.b16 %v126
  %v163 = vunpack.c.l.b16 %v127
  %v164 = vpack.c.b16 %v149, %v148
  %v165 = vpack.c.b16 %v151, %v150
  %v166 = vpack.c.b16 %v153, %v152
  %v167 = vpack.c.b16 %v155, %v154
  %v168 = vpack.c.b16 %v157, %v156
  %v169 = vpack.c.b16 %v159, %v158
  %v170 = vpack.c.b16 %v161, %v160
  %v171 = vpack.c.b16 %v163, %v162
  %180 = vmatpush.bf16.msra.mxu0 %v171
  %181 = vmatpush.bf16.msra.mxu0 %v170
  %182 = vmatpush.bf16.msra.mxu0 %v169
  %183 = vmatpush.bf16.msra.mxu0 %v168
  %184 = vmatpush.bf16.msra.mxu0 %v167
  %185 = vmatpush.bf16.msra.mxu0 %v166
  %186 = vmatpush.bf16.msra.mxu0 %v165
  %187 = vmatpush.bf16.msra.mxu0 %v164
  %188 = vmatmul.bf16.gmra.mxu0 %v24
  %v189 = vpop.f32.mrf.mxu0
  %v190 = vadd.f32 %v130, %v189
  %v191 = vpop.f32.mrf.mxu0
  %v192 = vadd.f32 %v130, %v191
  %193 = vdwg.mxu0
  %v194 = vtanh.pop %v190
  %v195 = vtanh.pop %v192
  %196 = vst.msk [vmem:[%s6] sm:$0xff] %vm109, %v194
  %197 = vst.msk [vmem:[%s6 + $0x8] sm:$0xff] %vm109, %v195
  // Predicated region
  $region22: #{transform_leafs.5} parent=0 // pred_check
    _
  $region23: #{transform_leafs.5} parent=0 // pred_check_branch
    %199 = sbr.rel (0) target = $region25
  $region24: #{transform_leafs.5} parent=0 // pred_region
    _
  $region25: #{transform_leafs.5} parent=0 // pred_fallthru
    _
  // Predicated region
  $region26: #{transform_leafs.5} parent=0 // pred_check
    _
  $region27: #{transform_leafs.5} parent=0 // pred_check_branch
    %201 = sbr.rel (0) target = $region29
  $region28: #{transform_leafs.5} parent=0 // pred_region
    _
  $region29: #{transform_leafs.5} parent=0 // pred_fallthru
    _
  // Predicated region
  $region30: #{transform_leafs.5} parent=0 // pred_check
    _
  $region31: #{transform_leafs.5} parent=0 // pred_check_branch
    %203 = sbr.rel (0) target = $region33
  $region32: #{transform_leafs.5} parent=0 // pred_region
    _
  $region33: #{transform_leafs.5} parent=0 // pred_fallthru
    _
  // Predicated region
  $region34: #{transform_leafs.5} parent=0 // pred_check
    _
  $region35: #{transform_leafs.5} parent=0 // pred_check_branch
    %205 = sbr.rel (0) target = $region37
  $region36: #{transform_leafs.5} parent=0 // pred_region
    _
  $region37: #{transform_leafs.5} parent=0 // pred_fallthru
    _

// kernel: transform_leafs.4
$region0: #{transform_leafs.4}
  #allocation0 [shape = 'u32[]', space=smem, size = 0x4, offset = 0x4, fixed_abs, tag = 'smem constant byte address 0x4 - core index']
  #allocation1 [shape = 'u32[72,128]{1,0:T(1,128)}', space=vmem, size = 0x9000, scoped, tag = 'internal scratch']
  #allocation2 [shape = 'f32[2,128]{1,0:T(2,128)}', space=vmem, size = 0x400, scoped, tag = 'scratch operand']
  #allocation3 [shape = 'f32[2,128]{1,0:T(2,128)}', space=vmem, size = 0x400, scoped, tag = 'scratch operand']
  %s0 = inlined_call_operand.vmem [shape: f32[8,2,512], index: 0, kind: input, shape index: {}]
  %s1 = inlined_call_operand.vmem [shape: f32[8,2,1], index: 1, kind: input, shape index: {}]
  %s2 = inlined_call_operand.vmem [shape: f32[1,128], index: 2, kind: input, shape index: {}]
  %s3 = inlined_call_operand.vmem [shape: f32[1,128], index: 3, kind: input, shape index: {}]
  %s4 = inlined_call_operand.vmem [shape: bf16[128,512], index: 4, kind: input, shape index: {}]
  %s5 = inlined_call_operand.vmem [shape: f32[8,2,128], index: 5, kind: output, shape index: {}]
  %s6 = sld [smem:[#allocation0]]
  $region34: #{transform_leafs.4} parent=0
    _
  %s8 = ssub.s32 1, %s6
  %s9 = scalar_select 0, %s8, %s6
  // Predicated region
  $region2: #{transform_leafs.4} parent=0 // pred_check
    _
  $region3: #{transform_leafs.4} parent=0 // pred_check_branch
    %11 = sbr.rel (0) target = $region5
  $region4: #{transform_leafs.4} parent=0 // pred_region
    _
  $region5: #{transform_leafs.4} parent=0 // pred_fallthru
    _
  // Predicated region
  $region6: #{transform_leafs.4} parent=0 // pred_check
    _
  $region7: #{transform_leafs.4} parent=0 // pred_check_branch
    %13 = sbr.rel (0) target = $region9
  $region8: #{transform_leafs.4} parent=0 // pred_region
    _
  $region9: #{transform_leafs.4} parent=0 // pred_fallthru
    _
  // Predicated region
  $region10: #{transform_leafs.4} parent=0 // pred_check
    _
  $region11: #{transform_leafs.4} parent=0 // pred_check_branch
    %15 = sbr.rel (0) target = $region13
  $region12: #{transform_leafs.4} parent=0 // pred_region
    _
  $region13: #{transform_leafs.4} parent=0 // pred_fallthru
    _
  // Predicated region
  $region14: #{transform_leafs.4} parent=0 // pred_check
    _
  $region15: #{transform_leafs.4} parent=0 // pred_check_branch
    %17 = sbr.rel (0) target = $region17
  $region16: #{transform_leafs.4} parent=0 // pred_region
    _
  $region17: #{transform_leafs.4} parent=0 // pred_fallthru
    _
  // Predicated region
  $region18: #{transform_leafs.4} parent=0 // pred_check
    _
  $region19: #{transform_leafs.4} parent=0 // pred_check_branch
    %19 = sbr.rel (0) target = $region21
  $region20: #{transform_leafs.4} parent=0 // pred_region
    _
  $region21: #{transform_leafs.4} parent=0 // pred_fallthru
    _
  %p20 = scmp.eq.s32.totalorder 0, 0
  // Predicated region
  $region22: #{transform_leafs.4} parent=0 // pred_check
    %p21 = pneg %p20
  $region23: #{transform_leafs.4} parent=0 // pred_check_branch
    %23 = sbr.rel (%p21) target = $region25
  $region24: #{transform_leafs.4} parent=0 // pred_region
    %v24 = vld [vmem:[%s2] sm:$0x1]
    %v26 = vperm.slane %v24, 0
    %28 = vst [vmem:[#allocation2] sm:$0x3] %v26
    %v29 = vld [vmem:[%s3] sm:$0x1]
    %v31 = vperm.slane %v29, 0
    %33 = vst [vmem:[#allocation3] sm:$0x3] %v31
  $region25: #{transform_leafs.4} parent=0 // pred_fallthru
    _
  %v34 = vld [vmem:[#allocation2] sm:$0x3]
  %v35 = vld [vmem:[#allocation3] sm:$0x3]
  %v36 = vld [vmem:[%s4] sm:$0xff]
  %v37 = vld [vmem:[%s4 + $0x8] sm:$0xff]
  %v38 = vld [vmem:[%s4 + $0x10] sm:$0xff]
  %v39 = vld [vmem:[%s4 + $0x18] sm:$0xff]
  %v40 = vld [vmem:[%s4 + $0x20] sm:$0xff]
  %v41 = vld [vmem:[%s4 + $0x28] sm:$0xff]
  %v42 = vld [vmem:[%s4 + $0x30] sm:$0xff]
  %v43 = vld [vmem:[%s4 + $0x38] sm:$0xff]
  %v44 = vld [vmem:[%s4 + $0x40] sm:$0xff]
  %v45 = vld [vmem:[%s4 + $0x48] sm:$0xff]
  %v46 = vld [vmem:[%s4 + $0x50] sm:$0xff]
  %v47 = vld [vmem:[%s4 + $0x58] sm:$0xff]
  %v48 = vld [vmem:[%s4 + $0x60] sm:$0xff]
  %v49 = vld [vmem:[%s4 + $0x68] sm:$0xff]
  %v50 = vld [vmem:[%s4 + $0x70] sm:$0xff]
  %v51 = vld [vmem:[%s4 + $0x78] sm:$0xff]
  %v52 = vld [vmem:[%s4 + $0x80] sm:$0xff]
  %v53 = vld [vmem:[%s4 + $0x88] sm:$0xff]
  %v54 = vld [vmem:[%s4 + $0x90] sm:$0xff]
  %v55 = vld [vmem:[%s4 + $0x98] sm:$0xff]
  %v56 = vld [vmem:[%s4 + $0xa0] sm:$0xff]
  %v57 = vld [vmem:[%s4 + $0xa8] sm:$0xff]
  %v58 = vld [vmem:[%s4 + $0xb0] sm:$0xff]
  %v59 = vld [vmem:[%s4 + $0xb8] sm:$0xff]
  %v60 = vld [vmem:[%s4 + $0xc0] sm:$0xff]
  %v61 = vld [vmem:[%s4 + $0xc8] sm:$0xff]
  %v62 = vld [vmem:[%s4 + $0xd0] sm:$0xff]
  %v63 = vld [vmem:[%s4 + $0xd8] sm:$0xff]
  %v64 = vld [vmem:[%s4 + $0xe0] sm:$0xff]
  %v65 = vld [vmem:[%s4 + $0xe8] sm:$0xff]
  %v66 = vld [vmem:[%s4 + $0xf0] sm:$0xff]
  %v67 = vld [vmem:[%s4 + $0xf8] sm:$0xff]
  %v68 = vld [vmem:[%s0] sm:$0xff]
  %v69 = vpack.c.bf16 %v34, %v34
  %v102 = vunpack.c.l.b16 %v36
  %v103 = vunpack.c.h.b16 %v36
  %v104 = vunpack.c.l.b16 %v37
  %v105 = vunpack.c.h.b16 %v37
  %v106 = vunpack.c.l.b16 %v38
  %v107 = vunpack.c.h.b16 %v38
  %v108 = vunpack.c.l.b16 %v39
  %v109 = vunpack.c.h.b16 %v39
  %v110 = vunpack.c.l.b16 %v40
  %v111 = vunpack.c.h.b16 %v40
  %v112 = vunpack.c.l.b16 %v41
  %v113 = vunpack.c.h.b16 %v41
  %v114 = vunpack.c.l.b16 %v42
  %v115 = vunpack.c.h.b16 %v42
  %v116 = vunpack.c.l.b16 %v43
  %v117 = vunpack.c.h.b16 %v43
  %v118 = vunpack.c.l.b16 %v44
  %v119 = vunpack.c.h.b16 %v44
  %v120 = vunpack.c.l.b16 %v45
  %v121 = vunpack.c.h.b16 %v45
  %v122 = vunpack.c.l.b16 %v46
  %v123 = vunpack.c.h.b16 %v46
  %v124 = vunpack.c.l.b16 %v47
  %v125 = vunpack.c.h.b16 %v47
  %v126 = vunpack.c.l.b16 %v48
  %v127 = vunpack.c.h.b16 %v48
  %v128 = vunpack.c.l.b16 %v49
  %v129 = vunpack.c.h.b16 %v49
  %v130 = vunpack.c.l.b16 %v50
  %v131 = vunpack.c.h.b16 %v50
  %v132 = vunpack.c.l.b16 %v51
  %v133 = vunpack.c.h.b16 %v51
  %v134 = vunpack.c.l.b16 %v52
  %v135 = vunpack.c.h.b16 %v52
  %v136 = vunpack.c.l.b16 %v53
  %v137 = vunpack.c.h.b16 %v53
  %v138 = vunpack.c.l.b16 %v54
  %v139 = vunpack.c.h.b16 %v54
  %v140 = vunpack.c.l.b16 %v55
  %v141 = vunpack.c.h.b16 %v55
  %v142 = vunpack.c.l.b16 %v56
  %v143 = vunpack.c.h.b16 %v56
  %v144 = vunpack.c.l.b16 %v57
  %v145 = vunpack.c.h.b16 %v57
  %v146 = vunpack.c.l.b16 %v58
  %v147 = vunpack.c.h.b16 %v58
  %v148 = vunpack.c.l.b16 %v59
  %v149 = vunpack.c.h.b16 %v59
  %v150 = vunpack.c.l.b16 %v60
  %v151 = vunpack.c.h.b16 %v60
  %v152 = vunpack.c.l.b16 %v61
  %v153 = vunpack.c.h.b16 %v61
  %v154 = vunpack.c.l.b16 %v62
  %v155 = vunpack.c.h.b16 %v62
  %v156 = vunpack.c.l.b16 %v63
  %v157 = vunpack.c.h.b16 %v63
  %v158 = vunpack.c.l.b16 %v64
  %v159 = vunpack.c.h.b16 %v64
  %v160 = vunpack.c.l.b16 %v65
  %v161 = vunpack.c.h.b16 %v65
  %v162 = vunpack.c.l.b16 %v66
  %v163 = vunpack.c.h.b16 %v66
  %v164 = vunpack.c.l.b16 %v67
  %v165 = vunpack.c.h.b16 %v67
  %v166 = vpack.c.b16 %v106, %v102
  %v167 = vpack.c.b16 %v107, %v103
  %v168 = vpack.c.b16 %v108, %v104
  %v169 = vpack.c.b16 %v109, %v105
  %v170 = vpack.c.b16 %v114, %v110
  %v171 = vpack.c.b16 %v115, %v111
  %v172 = vpack.c.b16 %v116, %v112
  %v173 = vpack.c.b16 %v117, %v113
  %v174 = vpack.c.b16 %v122, %v118
  %v175 = vpack.c.b16 %v123, %v119
  %v176 = vpack.c.b16 %v124, %v120
  %v177 = vpack.c.b16 %v125, %v121
  %v178 = vpack.c.b16 %v130, %v126
  %v179 = vpack.c.b16 %v131, %v127
  %v180 = vpack.c.b16 %v132, %v128
  %v181 = vpack.c.b16 %v133, %v129
  %v182 = vpack.c.b16 %v138, %v134
  %v183 = vpack.c.b16 %v139, %v135
  %v184 = vpack.c.b16 %v140, %v136
  %v185 = vpack.c.b16 %v141, %v137
  %v186 = vpack.c.b16 %v146, %v142
  %v187 = vpack.c.b16 %v147, %v143
  %v188 = vpack.c.b16 %v148, %v144
  %v189 = vpack.c.b16 %v149, %v145
  %v190 = vpack.c.b16 %v154, %v150
  %v191 = vpack.c.b16 %v155, %v151
  %v192 = vpack.c.b16 %v156, %v152
  %v193 = vpack.c.b16 %v157, %v153
  %v194 = vpack.c.b16 %v162, %v158
  %v195 = vpack.c.b16 %v163, %v159
  %v196 = vpack.c.b16 %v164, %v160
  %v197 = vpack.c.b16 %v165, %v161
  %230 = vmatpush.bf16.msra.mxu0 %v194
  %231 = vmatpush.bf16.msra.mxu0 %v190
  %232 = vmatpush.bf16.msra.mxu0 %v186
  %233 = vmatpush.bf16.msra.mxu0 %v182
  %234 = vmatpush.bf16.msra.mxu0 %v178
  %235 = vmatpush.bf16.msra.mxu0 %v174
  %236 = vmatpush.bf16.msra.mxu0 %v170
  %237 = vmatpush.bf16.msra.mxu0 %v166
  %238 = vmatmul.bf16.gmra.mxu0 %v69
  %v239 = vpop.f32.mrf.mxu0
  %v240 = vadd.f32 0.0, %v239
  %v241 = vpop.f32.mrf.mxu0
  %242 = vdwg.mxu0
  %243 = vmatpush.bf16.msra.mxu0 %v195
  %244 = vmatpush.bf16.msra.mxu0 %v191
  %245 = vmatpush.bf16.msra.mxu0 %v187
  %246 = vmatpush.bf16.msra.mxu0 %v183
  %247 = vmatpush.bf16.msra.mxu0 %v179
  %248 = vmatpush.bf16.msra.mxu0 %v175
  %249 = vmatpush.bf16.msra.mxu0 %v171
  %250 = vmatpush.bf16.msra.mxu0 %v167
  %251 = vmatmul.bf16.gmra.mxu0 %v69
  %v252 = vpop.f32.mrf.mxu0
  %v253 = vadd.f32 0.0, %v252
  %v254 = vpop.f32.mrf.mxu0
  %255 = vdwg.mxu0
  %256 = vmatpush.bf16.msra.mxu0 %v196
  %257 = vmatpush.bf16.msra.mxu0 %v192
  %258 = vmatpush.bf16.msra.mxu0 %v188
  %259 = vmatpush.bf16.msra.mxu0 %v184
  %260 = vmatpush.bf16.msra.mxu0 %v180
  %261 = vmatpush.bf16.msra.mxu0 %v176
  %262 = vmatpush.bf16.msra.mxu0 %v172
  %263 = vmatpush.bf16.msra.mxu0 %v168
  %264 = vmatmul.bf16.gmra.mxu0 %v69
  %v265 = vpop.f32.mrf.mxu0
  %v266 = vadd.f32 0.0, %v265
  %v267 = vpop.f32.mrf.mxu0
  %268 = vdwg.mxu0
  %269 = vmatpush.bf16.msra.mxu0 %v197
  %270 = vmatpush.bf16.msra.mxu0 %v193
  %271 = vmatpush.bf16.msra.mxu0 %v189
  %272 = vmatpush.bf16.msra.mxu0 %v185
  %273 = vmatpush.bf16.msra.mxu0 %v181
  %274 = vmatpush.bf16.msra.mxu0 %v177
  %275 = vmatpush.bf16.msra.mxu0 %v173
  %276 = vmatpush.bf16.msra.mxu0 %v169
  %277 = vmatmul.bf16.gmra.mxu0 %v69
  %v278 = vpop.f32.mrf.mxu0
  %v279 = vadd.f32 0.0, %v278
  %v280 = vpop.f32.mrf.mxu0
  %281 = vdwg.mxu0
  %v286 = vrot.slane %v253, 6
  %v287 = vrot.slane %v266, 4
  %v288 = vrot.slane %v279, 2
  %vm289 = vcmask 1041408
  %v290 = vsel %vm289, %v240, %v286
  %vm291 = vcmask 1045508
  %v292 = vsel %vm291, %v287, %v288
  %vm293 = vcmask 1043456
  %v294 = vsel %vm293, %v290, %v292
  %v296 = vadd.f32 %v68, %v294
  %v297 = vxor.u32 %v296, 2147483648
  %v298 = vmul.f32 %v297, 1.442695
  %v299 = vpow.pop %v298
  %v300 = vadd.f32 %v299, 1.0
  %v301 = vrcp.pop %v300
  %v302 = vmul.f32 %v300, %v301
  %v303 = vsub.f32 1.0, %v302
  %v304 = vmul.f32 %v301, %v303
  %v305 = vadd.f32 %v301, %v304
  %vm306 = vweird.f32 %v300
  %vm307 = vweird.f32 %v301
  %vm308 = vmor %vm306, %vm307
  %v309 = vsel %vm308, %v301, %v305
  %v310 = vand.u32 2147483647, %v300
  %vm311 = vcmp.eq.f32.partialorder %v310, 8.507059e+37
  %v312 = vand.u32 %v300, 2147483648
  %v313 = vor.u32 1.1754944e-38, %v312
  %v314 = vsel %vm311, %v313, %v309
  %v315 = vmul.f32 1.0, %v314
  %v317 = vrot.slane %v296, 2
  %v319 = vxor.u32 %v317, 2147483648
  %v320 = vmul.f32 %v319, 1.442695
  %v321 = vpow.pop %v320
  %v322 = vadd.f32 %v321, 1.0
  %v323 = vrcp.pop %v322
  %v324 = vmul.f32 %v322, %v323
  %v325 = vsub.f32 1.0, %v324
  %v326 = vmul.f32 %v323, %v325
  %v327 = vadd.f32 %v323, %v326
  %vm328 = vweird.f32 %v322
  %vm329 = vweird.f32 %v323
  %vm330 = vmor %vm328, %vm329
  %v331 = vsel %vm330, %v323, %v327
  %v332 = vand.u32 2147483647, %v322
  %vm333 = vcmp.eq.f32.partialorder %v332, 8.507059e+37
  %v334 = vand.u32 %v322, 2147483648
  %v335 = vor.u32 1.1754944e-38, %v334
  %v336 = vsel %vm333, %v335, %v331
  %v337 = vmul.f32 1.0, %v336
  %v338 = vrot.slane %v296, 4
  %v340 = vtanh.pop %v338
  %v341 = vrot.slane %v296, 6
  %v343 = vxor.u32 %v341, 2147483648
  %v344 = vmul.f32 %v343, 1.442695
  %v345 = vpow.pop %v344
  %v346 = vadd.f32 %v345, 1.0
  %v347 = vrcp.pop %v346
  %v348 = vmul.f32 %v346, %v347
  %v349 = vsub.f32 1.0, %v348
  %v350 = vmul.f32 %v347, %v349
  %v351 = vadd.f32 %v347, %v350
  %vm352 = vweird.f32 %v346
  %vm353 = vweird.f32 %v347
  %vm354 = vmor %vm352, %vm353
  %v355 = vsel %vm354, %v347, %v351
  %v356 = vand.u32 2147483647, %v346
  %vm357 = vcmp.eq.f32.partialorder %v356, 8.507059e+37
  %v358 = vand.u32 %v346, 2147483648
  %v359 = vor.u32 1.1754944e-38, %v358
  %v360 = vsel %vm357, %v359, %v355
  %v361 = vmul.f32 1.0, %v360
  %v362 = vmul.f32 %v337, %v35
  %v363 = vmul.f32 %v315, %v340
  %v364 = vadd.f32 %v362, %v363
  %v365 = vtanh.pop %v364
  %v366 = vmul.f32 %v361, %v365
  %v367 = vld [vmem:[%s1] sm:$0x3]
  %v368 = vsub.f32 1.0, %v367
  %370 = vset.pattern.permute.xlu0 0
  %371 = vperm.xlu0 %370, %v367
  %v372 = vpop.permute.xlu0 %371
  %v374 = vmul.f32 %v366, %v372
  %376 = vset.pattern.permute.xlu0 0
  %377 = vperm.xlu0 %376, %v368
  %v378 = vpop.permute.xlu0 %377
  %v380 = vmul.f32 %v34, %v378
  %v381 = vadd.f32 %v374, %v380
  %v382 = vmul.f32 %v364, %v372
  %v383 = vmul.f32 %v35, %v378
  %v384 = vadd.f32 %v382, %v383
  %385 = vst [vmem:[%s5] sm:$0x3] %v381
  %s386 = scalar_lea.vmem %s0, 8
  %v387 = vld [vmem:[%s386] sm:$0xff]
  %v388 = vpack.c.bf16 %v381, %v381
  %389 = vmatpush.bf16.msra.mxu0 %v194
  %390 = vmatpush.bf16.msra.mxu0 %v190
  %391 = vmatpush.bf16.msra.mxu0 %v186
  %392 = vmatpush.bf16.msra.mxu0 %v182
  %393 = vmatpush.bf16.msra.mxu0 %v178
  %394 = vmatpush.bf16.msra.mxu0 %v174
  %395 = vmatpush.bf16.msra.mxu0 %v170
  %396 = vmatpush.bf16.msra.mxu0 %v166
  %397 = vmatmul.bf16.gmra.mxu0 %v388
  %v398 = vpop.f32.mrf.mxu0
  %v399 = vadd.f32 0.0, %v398
  %v400 = vpop.f32.mrf.mxu0
  %401 = vdwg.mxu0
  %402 = vmatpush.bf16.msra.mxu0 %v195
  %403 = vmatpush.bf16.msra.mxu0 %v191
  %404 = vmatpush.bf16.msra.mxu0 %v187
  %405 = vmatpush.bf16.msra.mxu0 %v183
  %406 = vmatpush.bf16.msra.mxu0 %v179
  %407 = vmatpush.bf16.msra.mxu0 %v175
  %408 = vmatpush.bf16.msra.mxu0 %v171
  %409 = vmatpush.bf16.msra.mxu0 %v167
  %410 = vmatmul.bf16.gmra.mxu0 %v388
  %v411 = vpop.f32.mrf.mxu0
  %v412 = vadd.f32 0.0, %v411
  %v413 = vpop.f32.mrf.mxu0
  %414 = vdwg.mxu0
  %415 = vmatpush.bf16.msra.mxu0 %v196
  %416 = vmatpush.bf16.msra.mxu0 %v192
  %417 = vmatpush.bf16.msra.mxu0 %v188
  %418 = vmatpush.bf16.msra.mxu0 %v184
  %419 = vmatpush.bf16.msra.mxu0 %v180
  %420 = vmatpush.bf16.msra.mxu0 %v176
  %421 = vmatpush.bf16.msra.mxu0 %v172
  %422 = vmatpush.bf16.msra.mxu0 %v168
  %423 = vmatmul.bf16.gmra.mxu0 %v388
  %v424 = vpop.f32.mrf.mxu0
  %v425 = vadd.f32 0.0, %v424
  %v426 = vpop.f32.mrf.mxu0
  %427 = vdwg.mxu0
  %428 = vmatpush.bf16.msra.mxu0 %v197
  %429 = vmatpush.bf16.msra.mxu0 %v193
  %430 = vmatpush.bf16.msra.mxu0 %v189
  %431 = vmatpush.bf16.msra.mxu0 %v185
  %432 = vmatpush.bf16.msra.mxu0 %v181
  %433 = vmatpush.bf16.msra.mxu0 %v177
  %434 = vmatpush.bf16.msra.mxu0 %v173
  %435 = vmatpush.bf16.msra.mxu0 %v169
  %436 = vmatmul.bf16.gmra.mxu0 %v388
  %v437 = vpop.f32.mrf.mxu0
  %v438 = vadd.f32 0.0, %v437
  %v439 = vpop.f32.mrf.mxu0
  %440 = vdwg.mxu0
  %v445 = vrot.slane %v412, 6
  %v446 = vrot.slane %v425, 4
  %v447 = vrot.slane %v438, 2
  %v448 = vsel %vm289, %v399, %v445
  %v449 = vsel %vm291, %v446, %v447
  %v450 = vsel %vm293, %v448, %v449
  %v452 = vadd.f32 %v387, %v450
  %v453 = vxor.u32 %v452, 2147483648
  %v454 = vmul.f32 %v453, 1.442695
  %v455 = vpow.pop %v454
  %v456 = vadd.f32 %v455, 1.0
  %v457 = vrcp.pop %v456
  %v458 = vmul.f32 %v456, %v457
  %v459 = vsub.f32 1.0, %v458
  %v460 = vmul.f32 %v457, %v459
  %v461 = vadd.f32 %v457, %v460
  %vm462 = vweird.f32 %v456
  %vm463 = vweird.f32 %v457
  %vm464 = vmor %vm462, %vm463
  %v465 = vsel %vm464, %v457, %v461
  %v466 = vand.u32 2147483647, %v456
  %vm467 = vcmp.eq.f32.partialorder %v466, 8.507059e+37
  %v468 = vand.u32 %v456, 2147483648
  %v469 = vor.u32 1.1754944e-38, %v468
  %v470 = vsel %vm467, %v469, %v465
  %v471 = vmul.f32 1.0, %v470
  %v473 = vrot.slane %v452, 2
  %v475 = vxor.u32 %v473, 2147483648
  %v476 = vmul.f32 %v475, 1.442695
  %v477 = vpow.pop %v476
  %v478 = vadd.f32 %v477, 1.0
  %v479 = vrcp.pop %v478
  %v480 = vmul.f32 %v478, %v479
  %v481 = vsub.f32 1.0, %v480
  %v482 = vmul.f32 %v479, %v481
  %v483 = vadd.f32 %v479, %v482
  %vm484 = vweird.f32 %v478
  %vm485 = vweird.f32 %v479
  %vm486 = vmor %vm484, %vm485
  %v487 = vsel %vm486, %v479, %v483
  %v488 = vand.u32 2147483647, %v478
  %vm489 = vcmp.eq.f32.partialorder %v488, 8.507059e+37
  %v490 = vand.u32 %v478, 2147483648
  %v491 = vor.u32 1.1754944e-38, %v490
  %v492 = vsel %vm489, %v491, %v487
  %v493 = vmul.f32 1.0, %v492
  %v494 = vrot.slane %v452, 4
  %v496 = vtanh.pop %v494
  %v497 = vrot.slane %v452, 6
  %v499 = vxor.u32 %v497, 2147483648
  %v500 = vmul.f32 %v499, 1.442695
  %v501 = vpow.pop %v500
  %v502 = vadd.f32 %v501, 1.0
  %v503 = vrcp.pop %v502
  %v504 = vmul.f32 %v502, %v503
  %v505 = vsub.f32 1.0, %v504
  %v506 = vmul.f32 %v503, %v505
  %v507 = vadd.f32 %v503, %v506
  %vm508 = vweird.f32 %v502
  %vm509 = vweird.f32 %v503
  %vm510 = vmor %vm508, %vm509
  %v511 = vsel %vm510, %v503, %v507
  %v512 = vand.u32 2147483647, %v502
  %vm513 = vcmp.eq.f32.partialorder %v512, 8.507059e+37
  %v514 = vand.u32 %v502, 2147483648
  %v515 = vor.u32 1.1754944e-38, %v514
  %v516 = vsel %vm513, %v515, %v511
  %v517 = vmul.f32 1.0, %v516
  %v518 = vmul.f32 %v493, %v384
  %v519 = vmul.f32 %v471, %v496
  %v520 = vadd.f32 %v518, %v519
  %v521 = vtanh.pop %v520
  %v522 = vmul.f32 %v517, %v521
  %s523 = scalar_lea.vmem %s1, 2
  %v524 = vld [vmem:[%s523] sm:$0x3]
  %v525 = vsub.f32 1.0, %v524
  %527 = vset.pattern.permute.xlu0 0
  %528 = vperm.xlu0 %527, %v524
  %v529 = vpop.permute.xlu0 %528
  %v531 = vmul.f32 %v522, %v529
  %533 = vset.pattern.permute.xlu0 0
  %534 = vperm.xlu0 %533, %v525
  %v535 = vpop.permute.xlu0 %534
  %v537 = vmul.f32 %v381, %v535
  %v538 = vadd.f32 %v531, %v537
  %v539 = vmul.f32 %v520, %v529
  %v540 = vmul.f32 %v384, %v535
  %v541 = vadd.f32 %v539, %v540
  %s542 = scalar_lea.vmem %s5, 2
  %543 = vst [vmem:[%s542] sm:$0x3] %v538
  %s544 = scalar_lea.vmem %s0, 16
  %v545 = vld [vmem:[%s544] sm:$0xff]
  %v546 = vpack.c.bf16 %v538, %v538
  %547 = vmatpush.bf16.msra.mxu0 %v194
  %548 = vmatpush.bf16.msra.mxu0 %v190
  %549 = vmatpush.bf16.msra.mxu0 %v186
  %550 = vmatpush.bf16.msra.mxu0 %v182
  %551 = vmatpush.bf16.msra.mxu0 %v178
  %552 = vmatpush.bf16.msra.mxu0 %v174
  %553 = vmatpush.bf16.msra.mxu0 %v170
  %554 = vmatpush.bf16.msra.mxu0 %v166
  %555 = vmatmul.bf16.gmra.mxu0 %v546
  %v556 = vpop.f32.mrf.mxu0
  %v557 = vadd.f32 0.0, %v556
  %v558 = vpop.f32.mrf.mxu0
  %559 = vdwg.mxu0
  %560 = vmatpush.bf16.msra.mxu0 %v195
  %561 = vmatpush.bf16.msra.mxu0 %v191
  %562 = vmatpush.bf16.msra.mxu0 %v187
  %563 = vmatpush.bf16.msra.mxu0 %v183
  %564 = vmatpush.bf16.msra.mxu0 %v179
  %565 = vmatpush.bf16.msra.mxu0 %v175
  %566 = vmatpush.bf16.msra.mxu0 %v171
  %567 = vmatpush.bf16.msra.mxu0 %v167
  %568 = vmatmul.bf16.gmra.mxu0 %v546
  %v569 = vpop.f32.mrf.mxu0
  %v570 = vadd.f32 0.0, %v569
  %v571 = vpop.f32.mrf.mxu0
  %572 = vdwg.mxu0
  %573 = vmatpush.bf16.msra.mxu0 %v196
  %574 = vmatpush.bf16.msra.mxu0 %v192
  %575 = vmatpush.bf16.msra.mxu0 %v188
  %576 = vmatpush.bf16.msra.mxu0 %v184
  %577 = vmatpush.bf16.msra.mxu0 %v180
  %578 = vmatpush.bf16.msra.mxu0 %v176
  %579 = vmatpush.bf16.msra.mxu0 %v172
  %580 = vmatpush.bf16.msra.mxu0 %v168
  %581 = vmatmul.bf16.gmra.mxu0 %v546
  %v582 = vpop.f32.mrf.mxu0
  %v583 = vadd.f32 0.0, %v582
  %v584 = vpop.f32.mrf.mxu0
  %585 = vdwg.mxu0
  %586 = vmatpush.bf16.msra.mxu0 %v197
  %587 = vmatpush.bf16.msra.mxu0 %v193
  %588 = vmatpush.bf16.msra.mxu0 %v189
  %589 = vmatpush.bf16.msra.mxu0 %v185
  %590 = vmatpush.bf16.msra.mxu0 %v181
  %591 = vmatpush.bf16.msra.mxu0 %v177
  %592 = vmatpush.bf16.msra.mxu0 %v173
  %593 = vmatpush.bf16.msra.mxu0 %v169
  %594 = vmatmul.bf16.gmra.mxu0 %v546
  %v595 = vpop.f32.mrf.mxu0
  %v596 = vadd.f32 0.0, %v595
  %v597 = vpop.f32.mrf.mxu0
  %598 = vdwg.mxu0
  %v603 = vrot.slane %v570, 6
  %v604 = vrot.slane %v583, 4
  %v605 = vrot.slane %v596, 2
  %v606 = vsel %vm289, %v557, %v603
  %v607 = vsel %vm291, %v604, %v605
  %v608 = vsel %vm293, %v606, %v607
  %v610 = vadd.f32 %v545, %v608
  %v611 = vxor.u32 %v610, 2147483648
  %v612 = vmul.f32 %v611, 1.442695
  %v613 = vpow.pop %v612
  %v614 = vadd.f32 %v613, 1.0
  %v615 = vrcp.pop %v614
  %v616 = vmul.f32 %v614, %v615
  %v617 = vsub.f32 1.0, %v616
  %v618 = vmul.f32 %v615, %v617
  %v619 = vadd.f32 %v615, %v618
  %vm620 = vweird.f32 %v614
  %vm621 = vweird.f32 %v615
  %vm622 = vmor %vm620, %vm621
  %v623 = vsel %vm622, %v615, %v619
  %v624 = vand.u32 2147483647, %v614
  %vm625 = vcmp.eq.f32.partialorder %v624, 8.507059e+37
  %v626 = vand.u32 %v614, 2147483648
  %v627 = vor.u32 1.1754944e-38, %v626
  %v628 = vsel %vm625, %v627, %v623
  %v629 = vmul.f32 1.0, %v628
  %v631 = vrot.slane %v610, 2
  %v633 = vxor.u32 %v631, 2147483648
  %v634 = vmul.f32 %v633, 1.442695
  %v635 = vpow.pop %v634
  %v636 = vadd.f32 %v635, 1.0
  %v637 = vrcp.pop %v636
  %v638 = vmul.f32 %v636, %v637
  %v639 = vsub.f32 1.0, %v638
  %v640 = vmul.f32 %v637, %v639
  %v641 = vadd.f32 %v637, %v640
  %vm642 = vweird.f32 %v636
  %vm643 = vweird.f32 %v637
  %vm644 = vmor %vm642, %vm643
  %v645 = vsel %vm644, %v637, %v641
  %v646 = vand.u32 2147483647, %v636
  %vm647 = vcmp.eq.f32.partialorder %v646, 8.507059e+37
  %v648 = vand.u32 %v636, 2147483648
  %v649 = vor.u32 1.1754944e-38, %v648
  %v650 = vsel %vm647, %v649, %v645
  %v651 = vmul.f32 1.0, %v650
  %v652 = vrot.slane %v610, 4
  %v654 = vtanh.pop %v652
  %v655 = vrot.slane %v610, 6
  %v657 = vxor.u32 %v655, 2147483648
  %v658 = vmul.f32 %v657, 1.442695
  %v659 = vpow.pop %v658
  %v660 = vadd.f32 %v659, 1.0
  %v661 = vrcp.pop %v660
  %v662 = vmul.f32 %v660, %v661
  %v663 = vsub.f32 1.0, %v662
  %v664 = vmul.f32 %v661, %v663
  %v665 = vadd.f32 %v661, %v664
  %vm666 = vweird.f32 %v660
  %vm667 = vweird.f32 %v661
  %vm668 = vmor %vm666, %vm667
  %v669 = vsel %vm668, %v661, %v665
  %v670 = vand.u32 2147483647, %v660
  %vm671 = vcmp.eq.f32.partialorder %v670, 8.507059e+37
  %v672 = vand.u32 %v660, 2147483648
  %v673 = vor.u32 1.1754944e-38, %v672
  %v674 = vsel %vm671, %v673, %v669
  %v675 = vmul.f32 1.0, %v674
  %v676 = vmul.f32 %v651, %v541
  %v677 = vmul.f32 %v629, %v654
  %v678 = vadd.f32 %v676, %v677
  %v679 = vtanh.pop %v678
  %v680 = vmul.f32 %v675, %v679
  %s681 = scalar_lea.vmem %s1, 4
  %v682 = vld [vmem:[%s681] sm:$0x3]
  %v683 = vsub.f32 1.0, %v682
  %685 = vset.pattern.permute.xlu0 0
  %686 = vperm.xlu0 %685, %v682
  %v687 = vpop.permute.xlu0 %686
  %v689 = vmul.f32 %v680, %v687
  %691 = vset.pattern.permute.xlu0 0
  %692 = vperm.xlu0 %691, %v683
  %v693 = vpop.permute.xlu0 %692
  %v695 = vmul.f32 %v538, %v693
  %v696 = vadd.f32 %v689, %v695
  %v697 = vmul.f32 %v678, %v687
  %v698 = vmul.f32 %v541, %v693
  %v699 = vadd.f32 %v697, %v698
  %s700 = scalar_lea.vmem %s5, 4
  %701 = vst [vmem:[%s700] sm:$0x3] %v696
  %s702 = scalar_lea.vmem %s0, 24
  %v703 = vld [vmem:[%s702] sm:$0xff]
  %v704 = vpack.c.bf16 %v696, %v696
  %705 = vmatpush.bf16.msra.mxu0 %v194
  %706 = vmatpush.bf16.msra.mxu0 %v190
  %707 = vmatpush.bf16.msra.mxu0 %v186
  %708 = vmatpush.bf16.msra.mxu0 %v182
  %709 = vmatpush.bf16.msra.mxu0 %v178
  %710 = vmatpush.bf16.msra.mxu0 %v174
  %711 = vmatpush.bf16.msra.mxu0 %v170
  %712 = vmatpush.bf16.msra.mxu0 %v166
  %713 = vmatmul.bf16.gmra.mxu0 %v704
  %v714 = vpop.f32.mrf.mxu0
  %v715 = vadd.f32 0.0, %v714
  %v716 = vpop.f32.mrf.mxu0
  %717 = vdwg.mxu0
  %718 = vmatpush.bf16.msra.mxu0 %v195
  %719 = vmatpush.bf16.msra.mxu0 %v191
  %720 = vmatpush.bf16.msra.mxu0 %v187
  %721 = vmatpush.bf16.msra.mxu0 %v183
  %722 = vmatpush.bf16.msra.mxu0 %v179
  %723 = vmatpush.bf16.msra.mxu0 %v175
  %724 = vmatpush.bf16.msra.mxu0 %v171
  %725 = vmatpush.bf16.msra.mxu0 %v167
  %726 = vmatmul.bf16.gmra.mxu0 %v704
  %v727 = vpop.f32.mrf.mxu0
  %v728 = vadd.f32 0.0, %v727
  %v729 = vpop.f32.mrf.mxu0
  %730 = vdwg.mxu0
  %731 = vmatpush.bf16.msra.mxu0 %v196
  %732 = vmatpush.bf16.msra.mxu0 %v192
  %733 = vmatpush.bf16.msra.mxu0 %v188
  %734 = vmatpush.bf16.msra.mxu0 %v184
  %735 = vmatpush.bf16.msra.mxu0 %v180
  %736 = vmatpush.bf16.msra.mxu0 %v176
  %737 = vmatpush.bf16.msra.mxu0 %v172
  %738 = vmatpush.bf16.msra.mxu0 %v168
  %739 = vmatmul.bf16.gmra.mxu0 %v704
  %v740 = vpop.f32.mrf.mxu0
  %v741 = vadd.f32 0.0, %v740
  %v742 = vpop.f32.mrf.mxu0
  %743 = vdwg.mxu0
  %744 = vmatpush.bf16.msra.mxu0 %v197
  %745 = vmatpush.bf16.msra.mxu0 %v193
  %746 = vmatpush.bf16.msra.mxu0 %v189
  %747 = vmatpush.bf16.msra.mxu0 %v185
  %748 = vmatpush.bf16.msra.mxu0 %v181
  %749 = vmatpush.bf16.msra.mxu0 %v177
  %750 = vmatpush.bf16.msra.mxu0 %v173
  %751 = vmatpush.bf16.msra.mxu0 %v169
  %752 = vmatmul.bf16.gmra.mxu0 %v704
  %v753 = vpop.f32.mrf.mxu0
  %v754 = vadd.f32 0.0, %v753
  %v755 = vpop.f32.mrf.mxu0
  %756 = vdwg.mxu0
  %v761 = vrot.slane %v728, 6
  %v762 = vrot.slane %v741, 4
  %v763 = vrot.slane %v754, 2
  %v764 = vsel %vm289, %v715, %v761
  %v765 = vsel %vm291, %v762, %v763
  %v766 = vsel %vm293, %v764, %v765
  %v768 = vadd.f32 %v703, %v766
  %v769 = vxor.u32 %v768, 2147483648
  %v770 = vmul.f32 %v769, 1.442695
  %v771 = vpow.pop %v770
  %v772 = vadd.f32 %v771, 1.0
  %v773 = vrcp.pop %v772
  %v774 = vmul.f32 %v772, %v773
  %v775 = vsub.f32 1.0, %v774
  %v776 = vmul.f32 %v773, %v775
  %v777 = vadd.f32 %v773, %v776
  %vm778 = vweird.f32 %v772
  %vm779 = vweird.f32 %v773
  %vm780 = vmor %vm778, %vm779
  %v781 = vsel %vm780, %v773, %v777
  %v782 = vand.u32 2147483647, %v772
  %vm783 = vcmp.eq.f32.partialorder %v782, 8.507059e+37
  %v784 = vand.u32 %v772, 2147483648
  %v785 = vor.u32 1.1754944e-38, %v784
  %v786 = vsel %vm783, %v785, %v781
  %v787 = vmul.f32 1.0, %v786
  %v789 = vrot.slane %v768, 2
  %v791 = vxor.u32 %v789, 2147483648
  %v792 = vmul.f32 %v791, 1.442695
  %v793 = vpow.pop %v792
  %v794 = vadd.f32 %v793, 1.0
  %v795 = vrcp.pop %v794
  %v796 = vmul.f32 %v794, %v795
  %v797 = vsub.f32 1.0, %v796
  %v798 = vmul.f32 %v795, %v797
  %v799 = vadd.f32 %v795, %v798
  %vm800 = vweird.f32 %v794
  %vm801 = vweird.f32 %v795
  %vm802 = vmor %vm800, %vm801
  %v803 = vsel %vm802, %v795, %v799
  %v804 = vand.u32 2147483647, %v794
  %vm805 = vcmp.eq.f32.partialorder %v804, 8.507059e+37
  %v806 = vand.u32 %v794, 2147483648
  %v807 = vor.u32 1.1754944e-38, %v806
  %v808 = vsel %vm805, %v807, %v803
  %v809 = vmul.f32 1.0, %v808
  %v810 = vrot.slane %v768, 4
  %v812 = vtanh.pop %v810
  %v813 = vrot.slane %v768, 6
  %v815 = vxor.u32 %v813, 2147483648
  %v816 = vmul.f32 %v815, 1.442695
  %v817 = vpow.pop %v816
  %v818 = vadd.f32 %v817, 1.0
  %v819 = vrcp.pop %v818
  %v820 = vmul.f32 %v818, %v819
  %v821 = vsub.f32 1.0, %v820
  %v822 = vmul.f32 %v819, %v821
  %v823 = vadd.f32 %v819, %v822
  %vm824 = vweird.f32 %v818
  %vm825 = vweird.f32 %v819
  %vm826 = vmor %vm824, %vm825
  %v827 = vsel %vm826, %v819, %v823
  %v828 = vand.u32 2147483647, %v818
  %vm829 = vcmp.eq.f32.partialorder %v828, 8.507059e+37
  %v830 = vand.u32 %v818, 2147483648
  %v831 = vor.u32 1.1754944e-38, %v830
  %v832 = vsel %vm829, %v831, %v827
  %v833 = vmul.f32 1.0, %v832
  %v834 = vmul.f32 %v809, %v699
  %v835 = vmul.f32 %v787, %v812
  %v836 = vadd.f32 %v834, %v835
  %v837 = vtanh.pop %v836
  %v838 = vmul.f32 %v833, %v837
  %s839 = scalar_lea.vmem %s1, 6
  %v840 = vld [vmem:[%s839] sm:$0x3]
  %v841 = vsub.f32 1.0, %v840
  %843 = vset.pattern.permute.xlu0 0
  %844 = vperm.xlu0 %843, %v840
  %v845 = vpop.permute.xlu0 %844
  %v847 = vmul.f32 %v838, %v845
  %849 = vset.pattern.permute.xlu0 0
  %850 = vperm.xlu0 %849, %v841
  %v851 = vpop.permute.xlu0 %850
  %v853 = vmul.f32 %v696, %v851
  %v854 = vadd.f32 %v847, %v853
  %v855 = vmul.f32 %v836, %v845
  %v856 = vmul.f32 %v699, %v851
  %v857 = vadd.f32 %v855, %v856
  %s858 = scalar_lea.vmem %s5, 6
  %859 = vst [vmem:[%s858] sm:$0x3] %v854
  %s860 = scalar_lea.vmem %s0, 32
  %v861 = vld [vmem:[%s860] sm:$0xff]
  %v862 = vpack.c.bf16 %v854, %v854
  %863 = vmatpush.bf16.msra.mxu0 %v194
  %864 = vmatpush.bf16.msra.mxu0 %v190
  %865 = vmatpush.bf16.msra.mxu0 %v186
  %866 = vmatpush.bf16.msra.mxu0 %v182
  %867 = vmatpush.bf16.msra.mxu0 %v178
  %868 = vmatpush.bf16.msra.mxu0 %v174
  %869 = vmatpush.bf16.msra.mxu0 %v170
  %870 = vmatpush.bf16.msra.mxu0 %v166
  %871 = vmatmul.bf16.gmra.mxu0 %v862
  %v872 = vpop.f32.mrf.mxu0
  %v873 = vadd.f32 0.0, %v872
  %v874 = vpop.f32.mrf.mxu0
  %875 = vdwg.mxu0
  %876 = vmatpush.bf16.msra.mxu0 %v195
  %877 = vmatpush.bf16.msra.mxu0 %v191
  %878 = vmatpush.bf16.msra.mxu0 %v187
  %879 = vmatpush.bf16.msra.mxu0 %v183
  %880 = vmatpush.bf16.msra.mxu0 %v179
  %881 = vmatpush.bf16.msra.mxu0 %v175
  %882 = vmatpush.bf16.msra.mxu0 %v171
  %883 = vmatpush.bf16.msra.mxu0 %v167
  %884 = vmatmul.bf16.gmra.mxu0 %v862
  %v885 = vpop.f32.mrf.mxu0
  %v886 = vadd.f32 0.0, %v885
  %v887 = vpop.f32.mrf.mxu0
  %888 = vdwg.mxu0
  %889 = vmatpush.bf16.msra.mxu0 %v196
  %890 = vmatpush.bf16.msra.mxu0 %v192
  %891 = vmatpush.bf16.msra.mxu0 %v188
  %892 = vmatpush.bf16.msra.mxu0 %v184
  %893 = vmatpush.bf16.msra.mxu0 %v180
  %894 = vmatpush.bf16.msra.mxu0 %v176
  %895 = vmatpush.bf16.msra.mxu0 %v172
  %896 = vmatpush.bf16.msra.mxu0 %v168
  %897 = vmatmul.bf16.gmra.mxu0 %v862
  %v898 = vpop.f32.mrf.mxu0
  %v899 = vadd.f32 0.0, %v898
  %v900 = vpop.f32.mrf.mxu0
  %901 = vdwg.mxu0
  %902 = vmatpush.bf16.msra.mxu0 %v197
  %903 = vmatpush.bf16.msra.mxu0 %v193
  %904 = vmatpush.bf16.msra.mxu0 %v189
  %905 = vmatpush.bf16.msra.mxu0 %v185
  %906 = vmatpush.bf16.msra.mxu0 %v181
  %907 = vmatpush.bf16.msra.mxu0 %v177
  %908 = vmatpush.bf16.msra.mxu0 %v173
  %909 = vmatpush.bf16.msra.mxu0 %v169
  %910 = vmatmul.bf16.gmra.mxu0 %v862
  %v911 = vpop.f32.mrf.mxu0
  %v912 = vadd.f32 0.0, %v911
  %v913 = vpop.f32.mrf.mxu0
  %914 = vdwg.mxu0
  %v919 = vrot.slane %v886, 6
  %v920 = vrot.slane %v899, 4
  %v921 = vrot.slane %v912, 2
  %v922 = vsel %vm289, %v873, %v919
  %v923 = vsel %vm291, %v920, %v921
  %v924 = vsel %vm293, %v922, %v923
  %v926 = vadd.f32 %v861, %v924
  %v927 = vxor.u32 %v926, 2147483648
  %v928 = vmul.f32 %v927, 1.442695
  %v929 = vpow.pop %v928
  %v930 = vadd.f32 %v929, 1.0
  %v931 = vrcp.pop %v930
  %v932 = vmul.f32 %v930, %v931
  %v933 = vsub.f32 1.0, %v932
  %v934 = vmul.f32 %v931, %v933
  %v935 = vadd.f32 %v931, %v934
  %vm936 = vweird.f32 %v930
  %vm937 = vweird.f32 %v931
  %vm938 = vmor %vm936, %vm937
  %v939 = vsel %vm938, %v931, %v935
  %v940 = vand.u32 2147483647, %v930
  %vm941 = vcmp.eq.f32.partialorder %v940, 8.507059e+37
  %v942 = vand.u32 %v930, 2147483648
  %v943 = vor.u32 1.1754944e-38, %v942
  %v944 = vsel %vm941, %v943, %v939
  %v945 = vmul.f32 1.0, %v944
  %v947 = vrot.slane %v926, 2
  %v949 = vxor.u32 %v947, 2147483648
  %v950 = vmul.f32 %v949, 1.442695
  %v951 = vpow.pop %v950
  %v952 = vadd.f32 %v951, 1.0
  %v953 = vrcp.pop %v952
  %v954 = vmul.f32 %v952, %v953
  %v955 = vsub.f32 1.0, %v954
  %v956 = vmul.f32 %v953, %v955
  %v957 = vadd.f32 %v953, %v956
  %vm958 = vweird.f32 %v952
  %vm959 = vweird.f32 %v953
  %vm960 = vmor %vm958, %vm959
  %v961 = vsel %vm960, %v953, %v957
  %v962 = vand.u32 2147483647, %v952
  %vm963 = vcmp.eq.f32.partialorder %v962, 8.507059e+37
  %v964 = vand.u32 %v952, 2147483648
  %v965 = vor.u32 1.1754944e-38, %v964
  %v966 = vsel %vm963, %v965, %v961
  %v967 = vmul.f32 1.0, %v966
  %v968 = vrot.slane %v926, 4
  %v970 = vtanh.pop %v968
  %v971 = vrot.slane %v926, 6
  %v973 = vxor.u32 %v971, 2147483648
  %v974 = vmul.f32 %v973, 1.442695
  %v975 = vpow.pop %v974
  %v976 = vadd.f32 %v975, 1.0
  %v977 = vrcp.pop %v976
  %v978 = vmul.f32 %v976, %v977
  %v979 = vsub.f32 1.0, %v978
  %v980 = vmul.f32 %v977, %v979
  %v981 = vadd.f32 %v977, %v980
  %vm982 = vweird.f32 %v976
  %vm983 = vweird.f32 %v977
  %vm984 = vmor %vm982, %vm983
  %v985 = vsel %vm984, %v977, %v981
  %v986 = vand.u32 2147483647, %v976
  %vm987 = vcmp.eq.f32.partialorder %v986, 8.507059e+37
  %v988 = vand.u32 %v976, 2147483648
  %v989 = vor.u32 1.1754944e-38, %v988
  %v990 = vsel %vm987, %v989, %v985
  %v991 = vmul.f32 1.0, %v990
  %v992 = vmul.f32 %v967, %v857
  %v993 = vmul.f32 %v945, %v970
  %v994 = vadd.f32 %v992, %v993
  %v995 = vtanh.pop %v994
  %v996 = vmul.f32 %v991, %v995
  %s997 = scalar_lea.vmem %s1, 8
  %v998 = vld [vmem:[%s997] sm:$0x3]
  %v999 = vsub.f32 1.0, %v998
  %1001 = vset.pattern.permute.xlu0 0
  %1002 = vperm.xlu0 %1001, %v998
  %v1003 = vpop.permute.xlu0 %1002
  %v1005 = vmul.f32 %v996, %v1003
  %1007 = vset.pattern.permute.xlu0 0
  %1008 = vperm.xlu0 %1007, %v999
  %v1009 = vpop.permute.xlu0 %1008
  %v1011 = vmul.f32 %v854, %v1009
  %v1012 = vadd.f32 %v1005, %v1011
  %v1013 = vmul.f32 %v994, %v1003
  %v1014 = vmul.f32 %v857, %v1009
  %v1015 = vadd.f32 %v1013, %v1014
  %s1016 = scalar_lea.vmem %s5, 8
  %1017 = vst [vmem:[%s1016] sm:$0x3] %v1012
  %s1018 = scalar_lea.vmem %s0, 40
  %v1019 = vld [vmem:[%s1018] sm:$0xff]
  %v1020 = vpack.c.bf16 %v1012, %v1012
  %1021 = vmatpush.bf16.msra.mxu0 %v194
  %1022 = vmatpush.bf16.msra.mxu0 %v190
  %1023 = vmatpush.bf16.msra.mxu0 %v186
  %1024 = vmatpush.bf16.msra.mxu0 %v182
  %1025 = vmatpush.bf16.msra.mxu0 %v178
  %1026 = vmatpush.bf16.msra.mxu0 %v174
  %1027 = vmatpush.bf16.msra.mxu0 %v170
  %1028 = vmatpush.bf16.msra.mxu0 %v166
  %1029 = vmatmul.bf16.gmra.mxu0 %v1020
  %v1030 = vpop.f32.mrf.mxu0
  %v1031 = vadd.f32 0.0, %v1030
  %v1032 = vpop.f32.mrf.mxu0
  %1033 = vdwg.mxu0
  %1034 = vmatpush.bf16.msra.mxu0 %v195
  %1035 = vmatpush.bf16.msra.mxu0 %v191
  %1036 = vmatpush.bf16.msra.mxu0 %v187
  %1037 = vmatpush.bf16.msra.mxu0 %v183
  %1038 = vmatpush.bf16.msra.mxu0 %v179
  %1039 = vmatpush.bf16.msra.mxu0 %v175
  %1040 = vmatpush.bf16.msra.mxu0 %v171
  %1041 = vmatpush.bf16.msra.mxu0 %v167
  %1042 = vmatmul.bf16.gmra.mxu0 %v1020
  %v1043 = vpop.f32.mrf.mxu0
  %v1044 = vadd.f32 0.0, %v1043
  %v1045 = vpop.f32.mrf.mxu0
  %1046 = vdwg.mxu0
  %1047 = vmatpush.bf16.msra.mxu0 %v196
  %1048 = vmatpush.bf16.msra.mxu0 %v192
  %1049 = vmatpush.bf16.msra.mxu0 %v188
  %1050 = vmatpush.bf16.msra.mxu0 %v184
  %1051 = vmatpush.bf16.msra.mxu0 %v180
  %1052 = vmatpush.bf16.msra.mxu0 %v176
  %1053 = vmatpush.bf16.msra.mxu0 %v172
  %1054 = vmatpush.bf16.msra.mxu0 %v168
  %1055 = vmatmul.bf16.gmra.mxu0 %v1020
  %v1056 = vpop.f32.mrf.mxu0
  %v1057 = vadd.f32 0.0, %v1056
  %v1058 = vpop.f32.mrf.mxu0
  %1059 = vdwg.mxu0
  %1060 = vmatpush.bf16.msra.mxu0 %v197
  %1061 = vmatpush.bf16.msra.mxu0 %v193
  %1062 = vmatpush.bf16.msra.mxu0 %v189
  %1063 = vmatpush.bf16.msra.mxu0 %v185
  %1064 = vmatpush.bf16.msra.mxu0 %v181
  %1065 = vmatpush.bf16.msra.mxu0 %v177
  %1066 = vmatpush.bf16.msra.mxu0 %v173
  %1067 = vmatpush.bf16.msra.mxu0 %v169
  %1068 = vmatmul.bf16.gmra.mxu0 %v1020
  %v1069 = vpop.f32.mrf.mxu0
  %v1070 = vadd.f32 0.0, %v1069
  %v1071 = vpop.f32.mrf.mxu0
  %1072 = vdwg.mxu0
  %v1077 = vrot.slane %v1044, 6
  %v1078 = vrot.slane %v1057, 4
  %v1079 = vrot.slane %v1070, 2
  %v1080 = vsel %vm289, %v1031, %v1077
  %v1081 = vsel %vm291, %v1078, %v1079
  %v1082 = vsel %vm293, %v1080, %v1081
  %v1084 = vadd.f32 %v1019, %v1082
  %v1085 = vxor.u32 %v1084, 2147483648
  %v1086 = vmul.f32 %v1085, 1.442695
  %v1087 = vpow.pop %v1086
  %v1088 = vadd.f32 %v1087, 1.0
  %v1089 = vrcp.pop %v1088
  %v1090 = vmul.f32 %v1088, %v1089
  %v1091 = vsub.f32 1.0, %v1090
  %v1092 = vmul.f32 %v1089, %v1091
  %v1093 = vadd.f32 %v1089, %v1092
  %vm1094 = vweird.f32 %v1088
  %vm1095 = vweird.f32 %v1089
  %vm1096 = vmor %vm1094, %vm1095
  %v1097 = vsel %vm1096, %v1089, %v1093
  %v1098 = vand.u32 2147483647, %v1088
  %vm1099 = vcmp.eq.f32.partialorder %v1098, 8.507059e+37
  %v1100 = vand.u32 %v1088, 2147483648
  %v1101 = vor.u32 1.1754944e-38, %v1100
  %v1102 = vsel %vm1099, %v1101, %v1097
  %v1103 = vmul.f32 1.0, %v1102
  %v1105 = vrot.slane %v1084, 2
  %v1107 = vxor.u32 %v1105, 2147483648
  %v1108 = vmul.f32 %v1107, 1.442695
  %v1109 = vpow.pop %v1108
  %v1110 = vadd.f32 %v1109, 1.0
  %v1111 = vrcp.pop %v1110
  %v1112 = vmul.f32 %v1110, %v1111
  %v1113 = vsub.f32 1.0, %v1112
  %v1114 = vmul.f32 %v1111, %v1113
  %v1115 = vadd.f32 %v1111, %v1114
  %vm1116 = vweird.f32 %v1110
  %vm1117 = vweird.f32 %v1111
  %vm1118 = vmor %vm1116, %vm1117
  %v1119 = vsel %vm1118, %v1111, %v1115
  %v1120 = vand.u32 2147483647, %v1110
  %vm1121 = vcmp.eq.f32.partialorder %v1120, 8.507059e+37
  %v1122 = vand.u32 %v1110, 2147483648
  %v1123 = vor.u32 1.1754944e-38, %v1122
  %v1124 = vsel %vm1121, %v1123, %v1119
  %v1125 = vmul.f32 1.0, %v1124
  %v1126 = vrot.slane %v1084, 4
  %v1128 = vtanh.pop %v1126
  %v1129 = vrot.slane %v1084, 6
  %v1131 = vxor.u32 %v1129, 2147483648
  %v1132 = vmul.f32 %v1131, 1.442695
  %v1133 = vpow.pop %v1132
  %v1134 = vadd.f32 %v1133, 1.0
  %v1135 = vrcp.pop %v1134
  %v1136 = vmul.f32 %v1134, %v1135
  %v1137 = vsub.f32 1.0, %v1136
  %v1138 = vmul.f32 %v1135, %v1137
  %v1139 = vadd.f32 %v1135, %v1138
  %vm1140 = vweird.f32 %v1134
  %vm1141 = vweird.f32 %v1135
  %vm1142 = vmor %vm1140, %vm1141
  %v1143 = vsel %vm1142, %v1135, %v1139
  %v1144 = vand.u32 2147483647, %v1134
  %vm1145 = vcmp.eq.f32.partialorder %v1144, 8.507059e+37
  %v1146 = vand.u32 %v1134, 2147483648
  %v1147 = vor.u32 1.1754944e-38, %v1146
  %v1148 = vsel %vm1145, %v1147, %v1143
  %v1149 = vmul.f32 1.0, %v1148
  %v1150 = vmul.f32 %v1125, %v1015
  %v1151 = vmul.f32 %v1103, %v1128
  %v1152 = vadd.f32 %v1150, %v1151
  %v1153 = vtanh.pop %v1152
  %v1154 = vmul.f32 %v1149, %v1153
  %s1155 = scalar_lea.vmem %s1, 10
  %v1156 = vld [vmem:[%s1155] sm:$0x3]
  %v1157 = vsub.f32 1.0, %v1156
  %1159 = vset.pattern.permute.xlu0 0
  %1160 = vperm.xlu0 %1159, %v1156
  %v1161 = vpop.permute.xlu0 %1160
  %v1163 = vmul.f32 %v1154, %v1161
  %1165 = vset.pattern.permute.xlu0 0
  %1166 = vperm.xlu0 %1165, %v1157
  %v1167 = vpop.permute.xlu0 %1166
  %v1169 = vmul.f32 %v1012, %v1167
  %v1170 = vadd.f32 %v1163, %v1169
  %v1171 = vmul.f32 %v1152, %v1161
  %v1172 = vmul.f32 %v1015, %v1167
  %v1173 = vadd.f32 %v1171, %v1172
  %s1174 = scalar_lea.vmem %s5, 10
  %1175 = vst [vmem:[%s1174] sm:$0x3] %v1170
  %s1176 = scalar_lea.vmem %s0, 48
  %v1177 = vld [vmem:[%s1176] sm:$0xff]
  %v1178 = vpack.c.bf16 %v1170, %v1170
  %1179 = vmatpush.bf16.msra.mxu0 %v194
  %1180 = vmatpush.bf16.msra.mxu0 %v190
  %1181 = vmatpush.bf16.msra.mxu0 %v186
  %1182 = vmatpush.bf16.msra.mxu0 %v182
  %1183 = vmatpush.bf16.msra.mxu0 %v178
  %1184 = vmatpush.bf16.msra.mxu0 %v174
  %1185 = vmatpush.bf16.msra.mxu0 %v170
  %1186 = vmatpush.bf16.msra.mxu0 %v166
  %1187 = vmatmul.bf16.gmra.mxu0 %v1178
  %v1188 = vpop.f32.mrf.mxu0
  %v1189 = vadd.f32 0.0, %v1188
  %v1190 = vpop.f32.mrf.mxu0
  %1191 = vdwg.mxu0
  %1192 = vmatpush.bf16.msra.mxu0 %v195
  %1193 = vmatpush.bf16.msra.mxu0 %v191
  %1194 = vmatpush.bf16.msra.mxu0 %v187
  %1195 = vmatpush.bf16.msra.mxu0 %v183
  %1196 = vmatpush.bf16.msra.mxu0 %v179
  %1197 = vmatpush.bf16.msra.mxu0 %v175
  %1198 = vmatpush.bf16.msra.mxu0 %v171
  %1199 = vmatpush.bf16.msra.mxu0 %v167
  %1200 = vmatmul.bf16.gmra.mxu0 %v1178
  %v1201 = vpop.f32.mrf.mxu0
  %v1202 = vadd.f32 0.0, %v1201
  %v1203 = vpop.f32.mrf.mxu0
  %1204 = vdwg.mxu0
  %1205 = vmatpush.bf16.msra.mxu0 %v196
  %1206 = vmatpush.bf16.msra.mxu0 %v192
  %1207 = vmatpush.bf16.msra.mxu0 %v188
  %1208 = vmatpush.bf16.msra.mxu0 %v184
  %1209 = vmatpush.bf16.msra.mxu0 %v180
  %1210 = vmatpush.bf16.msra.mxu0 %v176
  %1211 = vmatpush.bf16.msra.mxu0 %v172
  %1212 = vmatpush.bf16.msra.mxu0 %v168
  %1213 = vmatmul.bf16.gmra.mxu0 %v1178
  %v1214 = vpop.f32.mrf.mxu0
  %v1215 = vadd.f32 0.0, %v1214
  %v1216 = vpop.f32.mrf.mxu0
  %1217 = vdwg.mxu0
  %1218 = vmatpush.bf16.msra.mxu0 %v197
  %1219 = vmatpush.bf16.msra.mxu0 %v193
  %1220 = vmatpush.bf16.msra.mxu0 %v189
  %1221 = vmatpush.bf16.msra.mxu0 %v185
  %1222 = vmatpush.bf16.msra.mxu0 %v181
  %1223 = vmatpush.bf16.msra.mxu0 %v177
  %1224 = vmatpush.bf16.msra.mxu0 %v173
  %1225 = vmatpush.bf16.msra.mxu0 %v169
  %1226 = vmatmul.bf16.gmra.mxu0 %v1178
  %v1227 = vpop.f32.mrf.mxu0
  %v1228 = vadd.f32 0.0, %v1227
  %v1229 = vpop.f32.mrf.mxu0
  %1230 = vdwg.mxu0
  %v1235 = vrot.slane %v1202, 6
  %v1236 = vrot.slane %v1215, 4
  %v1237 = vrot.slane %v1228, 2
  %v1238 = vsel %vm289, %v1189, %v1235
  %v1239 = vsel %vm291, %v1236, %v1237
  %v1240 = vsel %vm293, %v1238, %v1239
  %v1242 = vadd.f32 %v1177, %v1240
  %v1243 = vxor.u32 %v1242, 2147483648
  %v1244 = vmul.f32 %v1243, 1.442695
  %v1245 = vpow.pop %v1244
  %v1246 = vadd.f32 %v1245, 1.0
  %v1247 = vrcp.pop %v1246
  %v1248 = vmul.f32 %v1246, %v1247
  %v1249 = vsub.f32 1.0, %v1248
  %v1250 = vmul.f32 %v1247, %v1249
  %v1251 = vadd.f32 %v1247, %v1250
  %vm1252 = vweird.f32 %v1246
  %vm1253 = vweird.f32 %v1247
  %vm1254 = vmor %vm1252, %vm1253
  %v1255 = vsel %vm1254, %v1247, %v1251
  %v1256 = vand.u32 2147483647, %v1246
  %vm1257 = vcmp.eq.f32.partialorder %v1256, 8.507059e+37
  %v1258 = vand.u32 %v1246, 2147483648
  %v1259 = vor.u32 1.1754944e-38, %v1258
  %v1260 = vsel %vm1257, %v1259, %v1255
  %v1261 = vmul.f32 1.0, %v1260
  %v1263 = vrot.slane %v1242, 2
  %v1265 = vxor.u32 %v1263, 2147483648
  %v1266 = vmul.f32 %v1265, 1.442695
  %v1267 = vpow.pop %v1266
  %v1268 = vadd.f32 %v1267, 1.0
  %v1269 = vrcp.pop %v1268
  %v1270 = vmul.f32 %v1268, %v1269
  %v1271 = vsub.f32 1.0, %v1270
  %v1272 = vmul.f32 %v1269, %v1271
  %v1273 = vadd.f32 %v1269, %v1272
  %vm1274 = vweird.f32 %v1268
  %vm1275 = vweird.f32 %v1269
  %vm1276 = vmor %vm1274, %vm1275
  %v1277 = vsel %vm1276, %v1269, %v1273
  %v1278 = vand.u32 2147483647, %v1268
  %vm1279 = vcmp.eq.f32.partialorder %v1278, 8.507059e+37
  %v1280 = vand.u32 %v1268, 2147483648
  %v1281 = vor.u32 1.1754944e-38, %v1280
  %v1282 = vsel %vm1279, %v1281, %v1277
  %v1283 = vmul.f32 1.0, %v1282
  %v1284 = vrot.slane %v1242, 4
  %v1286 = vtanh.pop %v1284
  %v1287 = vrot.slane %v1242, 6
  %v1289 = vxor.u32 %v1287, 2147483648
  %v1290 = vmul.f32 %v1289, 1.442695
  %v1291 = vpow.pop %v1290
  %v1292 = vadd.f32 %v1291, 1.0
  %v1293 = vrcp.pop %v1292
  %v1294 = vmul.f32 %v1292, %v1293
  %v1295 = vsub.f32 1.0, %v1294
  %v1296 = vmul.f32 %v1293, %v1295
  %v1297 = vadd.f32 %v1293, %v1296
  %vm1298 = vweird.f32 %v1292
  %vm1299 = vweird.f32 %v1293
  %vm1300 = vmor %vm1298, %vm1299
  %v1301 = vsel %vm1300, %v1293, %v1297
  %v1302 = vand.u32 2147483647, %v1292
  %vm1303 = vcmp.eq.f32.partialorder %v1302, 8.507059e+37
  %v1304 = vand.u32 %v1292, 2147483648
  %v1305 = vor.u32 1.1754944e-38, %v1304
  %v1306 = vsel %vm1303, %v1305, %v1301
  %v1307 = vmul.f32 1.0, %v1306
  %v1308 = vmul.f32 %v1283, %v1173
  %v1309 = vmul.f32 %v1261, %v1286
  %v1310 = vadd.f32 %v1308, %v1309
  %v1311 = vtanh.pop %v1310
  %v1312 = vmul.f32 %v1307, %v1311
  %s1313 = scalar_lea.vmem %s1, 12
  %v1314 = vld [vmem:[%s1313] sm:$0x3]
  %v1315 = vsub.f32 1.0, %v1314
  %1317 = vset.pattern.permute.xlu0 0
  %1318 = vperm.xlu0 %1317, %v1314
  %v1319 = vpop.permute.xlu0 %1318
  %v1321 = vmul.f32 %v1312, %v1319
  %1323 = vset.pattern.permute.xlu0 0
  %1324 = vperm.xlu0 %1323, %v1315
  %v1325 = vpop.permute.xlu0 %1324
  %v1327 = vmul.f32 %v1170, %v1325
  %v1328 = vadd.f32 %v1321, %v1327
  %v1329 = vmul.f32 %v1310, %v1319
  %v1330 = vmul.f32 %v1173, %v1325
  %v1331 = vadd.f32 %v1329, %v1330
  %s1332 = scalar_lea.vmem %s5, 12
  %1333 = vst [vmem:[%s1332] sm:$0x3] %v1328
  %s1334 = scalar_lea.vmem %s0, 56
  %v1335 = vld [vmem:[%s1334] sm:$0xff]
  %v1336 = vpack.c.bf16 %v1328, %v1328
  %1337 = vmatpush.bf16.msra.mxu0 %v194
  %1338 = vmatpush.bf16.msra.mxu0 %v190
  %1339 = vmatpush.bf16.msra.mxu0 %v186
  %1340 = vmatpush.bf16.msra.mxu0 %v182
  %1341 = vmatpush.bf16.msra.mxu0 %v178
  %1342 = vmatpush.bf16.msra.mxu0 %v174
  %1343 = vmatpush.bf16.msra.mxu0 %v170
  %1344 = vmatpush.bf16.msra.mxu0 %v166
  %1345 = vmatmul.bf16.gmra.mxu0 %v1336
  %v1346 = vpop.f32.mrf.mxu0
  %v1347 = vadd.f32 0.0, %v1346
  %v1348 = vpop.f32.mrf.mxu0
  %1349 = vdwg.mxu0
  %1350 = vmatpush.bf16.msra.mxu0 %v195
  %1351 = vmatpush.bf16.msra.mxu0 %v191
  %1352 = vmatpush.bf16.msra.mxu0 %v187
  %1353 = vmatpush.bf16.msra.mxu0 %v183
  %1354 = vmatpush.bf16.msra.mxu0 %v179
  %1355 = vmatpush.bf16.msra.mxu0 %v175
  %1356 = vmatpush.bf16.msra.mxu0 %v171
  %1357 = vmatpush.bf16.msra.mxu0 %v167
  %1358 = vmatmul.bf16.gmra.mxu0 %v1336
  %v1359 = vpop.f32.mrf.mxu0
  %v1360 = vadd.f32 0.0, %v1359
  %v1361 = vpop.f32.mrf.mxu0
  %1362 = vdwg.mxu0
  %1363 = vmatpush.bf16.msra.mxu0 %v196
  %1364 = vmatpush.bf16.msra.mxu0 %v192
  %1365 = vmatpush.bf16.msra.mxu0 %v188
  %1366 = vmatpush.bf16.msra.mxu0 %v184
  %1367 = vmatpush.bf16.msra.mxu0 %v180
  %1368 = vmatpush.bf16.msra.mxu0 %v176
  %1369 = vmatpush.bf16.msra.mxu0 %v172
  %1370 = vmatpush.bf16.msra.mxu0 %v168
  %1371 = vmatmul.bf16.gmra.mxu0 %v1336
  %v1372 = vpop.f32.mrf.mxu0
  %v1373 = vadd.f32 0.0, %v1372
  %v1374 = vpop.f32.mrf.mxu0
  %1375 = vdwg.mxu0
  %1376 = vmatpush.bf16.msra.mxu0 %v197
  %1377 = vmatpush.bf16.msra.mxu0 %v193
  %1378 = vmatpush.bf16.msra.mxu0 %v189
  %1379 = vmatpush.bf16.msra.mxu0 %v185
  %1380 = vmatpush.bf16.msra.mxu0 %v181
  %1381 = vmatpush.bf16.msra.mxu0 %v177
  %1382 = vmatpush.bf16.msra.mxu0 %v173
  %1383 = vmatpush.bf16.msra.mxu0 %v169
  %1384 = vmatmul.bf16.gmra.mxu0 %v1336
  %v1385 = vpop.f32.mrf.mxu0
  %v1386 = vadd.f32 0.0, %v1385
  %v1387 = vpop.f32.mrf.mxu0
  %1388 = vdwg.mxu0
  %v1393 = vrot.slane %v1360, 6
  %v1394 = vrot.slane %v1373, 4
  %v1395 = vrot.slane %v1386, 2
  %v1396 = vsel %vm289, %v1347, %v1393
  %v1397 = vsel %vm291, %v1394, %v1395
  %v1398 = vsel %vm293, %v1396, %v1397
  %v1400 = vadd.f32 %v1335, %v1398
  %v1401 = vxor.u32 %v1400, 2147483648
  %v1402 = vmul.f32 %v1401, 1.442695
  %v1403 = vpow.pop %v1402
  %v1404 = vadd.f32 %v1403, 1.0
  %v1405 = vrcp.pop %v1404
  %v1406 = vmul.f32 %v1404, %v1405
  %v1407 = vsub.f32 1.0, %v1406
  %v1408 = vmul.f32 %v1405, %v1407
  %v1409 = vadd.f32 %v1405, %v1408
  %vm1410 = vweird.f32 %v1404
  %vm1411 = vweird.f32 %v1405
  %vm1412 = vmor %vm1410, %vm1411
  %v1413 = vsel %vm1412, %v1405, %v1409
  %v1414 = vand.u32 2147483647, %v1404
  %vm1415 = vcmp.eq.f32.partialorder %v1414, 8.507059e+37
  %v1416 = vand.u32 %v1404, 2147483648
  %v1417 = vor.u32 1.1754944e-38, %v1416
  %v1418 = vsel %vm1415, %v1417, %v1413
  %v1419 = vmul.f32 1.0, %v1418
  %v1421 = vrot.slane %v1400, 2
  %v1423 = vxor.u32 %v1421, 2147483648
  %v1424 = vmul.f32 %v1423, 1.442695
  %v1425 = vpow.pop %v1424
  %v1426 = vadd.f32 %v1425, 1.0
  %v1427 = vrcp.pop %v1426
  %v1428 = vmul.f32 %v1426, %v1427
  %v1429 = vsub.f32 1.0, %v1428
  %v1430 = vmul.f32 %v1427, %v1429
  %v1431 = vadd.f32 %v1427, %v1430
  %vm1432 = vweird.f32 %v1426
  %vm1433 = vweird.f32 %v1427
  %vm1434 = vmor %vm1432, %vm1433
  %v1435 = vsel %vm1434, %v1427, %v1431
  %v1436 = vand.u32 2147483647, %v1426
  %vm1437 = vcmp.eq.f32.partialorder %v1436, 8.507059e+37
  %v1438 = vand.u32 %v1426, 2147483648
  %v1439 = vor.u32 1.1754944e-38, %v1438
  %v1440 = vsel %vm1437, %v1439, %v1435
  %v1441 = vmul.f32 1.0, %v1440
  %v1442 = vrot.slane %v1400, 4
  %v1444 = vtanh.pop %v1442
  %v1445 = vrot.slane %v1400, 6
  %v1447 = vxor.u32 %v1445, 2147483648
  %v1448 = vmul.f32 %v1447, 1.442695
  %v1449 = vpow.pop %v1448
  %v1450 = vadd.f32 %v1449, 1.0
  %v1451 = vrcp.pop %v1450
  %v1452 = vmul.f32 %v1450, %v1451
  %v1453 = vsub.f32 1.0, %v1452
  %v1454 = vmul.f32 %v1451, %v1453
  %v1455 = vadd.f32 %v1451, %v1454
  %vm1456 = vweird.f32 %v1450
  %vm1457 = vweird.f32 %v1451
  %vm1458 = vmor %vm1456, %vm1457
  %v1459 = vsel %vm1458, %v1451, %v1455
  %v1460 = vand.u32 2147483647, %v1450
  %vm1461 = vcmp.eq.f32.partialorder %v1460, 8.507059e+37
  %v1462 = vand.u32 %v1450, 2147483648
  %v1463 = vor.u32 1.1754944e-38, %v1462
  %v1464 = vsel %vm1461, %v1463, %v1459
  %v1465 = vmul.f32 1.0, %v1464
  %v1466 = vmul.f32 %v1441, %v1331
  %v1467 = vmul.f32 %v1419, %v1444
  %v1468 = vadd.f32 %v1466, %v1467
  %v1469 = vtanh.pop %v1468
  %v1470 = vmul.f32 %v1465, %v1469
  %s1471 = scalar_lea.vmem %s1, 14
  %v1472 = vld [vmem:[%s1471] sm:$0x3]
  %v1473 = vsub.f32 1.0, %v1472
  %1475 = vset.pattern.permute.xlu0 0
  %1476 = vperm.xlu0 %1475, %v1472
  %v1477 = vpop.permute.xlu0 %1476
  %v1479 = vmul.f32 %v1470, %v1477
  %1481 = vset.pattern.permute.xlu0 0
  %1482 = vperm.xlu0 %1481, %v1473
  %v1483 = vpop.permute.xlu0 %1482
  %v1485 = vmul.f32 %v1328, %v1483
  %v1486 = vadd.f32 %v1479, %v1485
  %v1487 = vmul.f32 %v1468, %v1477
  %v1488 = vmul.f32 %v1331, %v1483
  %v1489 = vadd.f32 %v1487, %v1488
  %s1490 = scalar_lea.vmem %s5, 14
  %1491 = vst [vmem:[%s1490] sm:$0x3] %v1486
  %1492 = vst [vmem:[#allocation2] sm:$0x3] %v1486
  %1493 = vst [vmem:[#allocation3] sm:$0x3] %v1489
  // Predicated region
  $region26: #{transform_leafs.4} parent=0 // pred_check
    _
  $region27: #{transform_leafs.4} parent=0 // pred_check_branch
    %1495 = sbr.rel (0) target = $region29
  $region28: #{transform_leafs.4} parent=0 // pred_region
    _
  $region29: #{transform_leafs.4} parent=0 // pred_fallthru
    _
  // Predicated region
  $region30: #{transform_leafs.4} parent=0 // pred_check
    _
  $region31: #{transform_leafs.4} parent=0 // pred_check_branch
    %1497 = sbr.rel (0) target = $region33
  $region32: #{transform_leafs.4} parent=0 // pred_region
    _
  $region33: #{transform_leafs.4} parent=0 // pred_fallthru
    _

</llo_original>
